<compile_context>
chip_gen: v7x
topology: tpu7x:2x2x1
jax: 0.10.0
libtpu: 0.0.40
codegen_flags: <defaults>
</compile_context>

<pallas_src>
import functools

import jax
import jax.numpy as jnp
from jax.experimental import pallas as pl
from jax.experimental.pallas import tpu as pltpu

IN_RAW = 28 * 28   # 784
IN_PAD = 896       # 784 rounded up to a multiple of 128 lanes
HID = 512
OUT_RAW = 10
OUT_PAD = 128      # lane-dense output slab; sliced back to 10 in the wrapper


def mlp_kernel(x_ref, w1_ref, b1_ref, w2_ref, b2_ref, w3_ref, b3_ref, o_ref):
    # bf16 MXU matmuls with f32 accumulation; bias + ReLU epilogue in f32.
    x = x_ref[...]                                                          # (TB, 896) bf16
    h1 = jnp.dot(x, w1_ref[...], preferred_element_type=jnp.float32) + b1_ref[...]
    h1 = jnp.maximum(h1, 0.0)
    h2 = jnp.dot(h1.astype(jnp.bfloat16), w2_ref[...],
                 preferred_element_type=jnp.float32) + b2_ref[...]
    h2 = jnp.maximum(h2, 0.0)
    logits = jnp.dot(h2.astype(jnp.bfloat16), w3_ref[...],
                     preferred_element_type=jnp.float32) + b3_ref[...]
    o_ref[...] = logits.astype(o_ref.dtype)                                 # (TB, 128) f32


def _round_up(v, m):
    return ((v + m - 1) // m) * m


@jax.jit
def neural_network_forward(x, params):
    """x: (B, 28, 28) float32. Returns logits (B, 10) float32."""
    w1, b1, w2, b2, w3, b3 = params   # w*: bf16, (in,out) padded; b*: f32, (1,out) padded
    B = x.shape[0]
    x_flat = x.reshape(B, IN_RAW)     # nn.Flatten

    # Adaptive batch tile: big batches -> 128-row tiles; tiny batches -> tight 8-aligned tile.
    TB = 128 if B >= 128 else max(8, _round_up(B, 8))
    B_pad = _round_up(B, TB)

    # Zero-pad features 784->896 and batch up to a multiple of TB; activations -> bf16.
    x_p = jnp.pad(x_flat.astype(jnp.bfloat16),
                  ((0, B_pad - B), (0, IN_PAD - IN_RAW)))

    n_tiles = B_pad // TB
    const = lambda shape: pl.BlockSpec(shape, lambda i: (0, 0))  # resident across grid steps

    out = pl.pallas_call(
        mlp_kernel,
        out_shape=jax.ShapeDtypeStruct((B_pad, OUT_PAD), jnp.float32),
        grid=(n_tiles,),
        in_specs=[
            pl.BlockSpec((TB, IN_PAD), lambda i: (i, 0)),   # x: tiled over batch (pipelined)
            const(w1.shape), const(b1.shape),
            const(w2.shape), const(b2.shape),
            const(w3.shape), const(b3.shape),
        ],
        out_specs=pl.BlockSpec((TB, OUT_PAD), lambda i: (i, 0)),
        compiler_params=pltpu.CompilerParams(
            dimension_semantics=("parallel",),   # v7x: shard batch tiles across both TCs
            vmem_limit_bytes=16 << 20,           # weights ~1.6 MiB bf16 + tiles; ample headroom
        ),
    )(x_p, w1, b1, w2, b2, w3, b3)

    return out[:B, :OUT_RAW]


def init_params_f32(key):
    # PyTorch-style uniform init; weights stored as (in, out) = PyTorch weight.T
    k1, k2, k3, k4, k5, k6 = jax.random.split(key, 6)

    def uniform(k, shape, fan_in):
        bound = 1.0 / jnp.sqrt(fan_in)
        return jax.random.uniform(k, shape, jnp.float32, -bound, bound)

    w1 = uniform(k1, (IN_RAW, HID), 784.0)
    b1 = uniform(k2, (1, HID), 784.0)
    w2 = uniform(k3, (HID, HID), 512.0)
    b2 = uniform(k4, (1, HID), 512.0)
    w3 = uniform(k5, (HID, OUT_RAW), 512.0)
    b3 = uniform(k6, (1, OUT_RAW), 512.0)
    return (w1, b1, w2, b2, w3, b3)


def pad_and_cast_params(p32):
    w1, b1, w2, b2, w3, b3 = p32
    # Zero-pad K of layer 1 (784->896) and N of layer 3 (10->128); weights -> bf16.
    w1_p = jnp.pad(w1, ((0, IN_PAD - IN_RAW), (0, 0))).astype(jnp.bfloat16)
    w3_p = jnp.pad(w3, ((0, 0), (0, OUT_PAD - OUT_RAW))).astype(jnp.bfloat16)
    b3_p = jnp.pad(b3, ((0, 0), (0, OUT_PAD - OUT_RAW)))
    return (w1_p, b1, w2.astype(jnp.bfloat16), b2, w3_p, b3_p)


if __name__ == "__main__":
    key = jax.random.PRNGKey(0)
    pkey, xkey = jax.random.split(key)
    params32 = init_params_f32(pkey)
    params = pad_and_cast_params(params32)

    # Small batch of 28x28 "images" (reference module uses torch.rand(1, 28, 28))
    x = jax.random.uniform(xkey, (2, 28, 28), jnp.float32)

    logits = neural_network_forward(x, params)
    jax.block_until_ready(logits)
    assert logits.shape == (2, 10)

    # Pure-JAX reference mimicking the kernel's numerics (bf16 inputs, f32 accumulation)
    w1, b1, w2, b2, w3, b3 = params32
    xf = x.reshape(x.shape[0], -1).astype(jnp.bfloat16)
    h1 = jnp.maximum(jnp.dot(xf, w1.astype(jnp.bfloat16),
                             preferred_element_type=jnp.float32) + b1, 0.0)
    h2 = jnp.maximum(jnp.dot(h1.astype(jnp.bfloat16), w2.astype(jnp.bfloat16),
                             preferred_element_type=jnp.float32) + b2, 0.0)
    ref = jnp.dot(h2.astype(jnp.bfloat16), w3.astype(jnp.bfloat16),
                  preferred_element_type=jnp.float32) + b3

    assert jnp.allclose(logits, ref, atol=1e-2, rtol=1e-2), (
        f"max abs err = {jnp.max(jnp.abs(logits - ref))}")

    print("KERNEL_OK")
</pallas_src>

<mosaic_0001>
module attributes {stable_mosaic.version = 11 : i64} {
  func.func @mlp_kernel(%arg0: i32, %arg1: memref<8x896xbf16, #tpu.memory_space<vmem>>, %arg2: memref<896x512xbf16, #tpu.memory_space<vmem>>, %arg3: memref<1x512xf32, #tpu.memory_space<vmem>>, %arg4: memref<512x512xbf16, #tpu.memory_space<vmem>>, %arg5: memref<1x512xf32, #tpu.memory_space<vmem>>, %arg6: memref<512x128xbf16, #tpu.memory_space<vmem>>, %arg7: memref<1x128xf32, #tpu.memory_space<vmem>>, %arg8: memref<8x128xf32, #tpu.memory_space<vmem>>) attributes {dimension_semantics = [#tpu.dimension_semantics<parallel>], iteration_bounds = array<i64: 1>, scalar_prefetch = 0 : i64, scratch_operands = 0 : i64, tpu.core_type = #tpu.core_type<tc>, window_params = [{transform_indices = @transform_0, window_bounds = array<i64: 8, 896>}, {pipeline_mode = #tpu.pipeline_mode<synchronous>, transform_indices = @transform_1, window_bounds = array<i64: 896, 512>}, {pipeline_mode = #tpu.pipeline_mode<synchronous>, transform_indices = @transform_2, window_bounds = array<i64: 1, 512>}, {pipeline_mode = #tpu.pipeline_mode<synchronous>, transform_indices = @transform_3, window_bounds = array<i64: 512, 512>}, {pipeline_mode = #tpu.pipeline_mode<synchronous>, transform_indices = @transform_4, window_bounds = array<i64: 1, 512>}, {pipeline_mode = #tpu.pipeline_mode<synchronous>, transform_indices = @transform_5, window_bounds = array<i64: 512, 128>}, {pipeline_mode = #tpu.pipeline_mode<synchronous>, transform_indices = @transform_6, window_bounds = array<i64: 1, 128>}, {transform_indices = @transform_7, window_bounds = array<i64: 8, 128>}]} {
    %c0 = arith.constant 0 : index
    %c0_0 = arith.constant 0 : index
    %0 = vector.load %arg1[%c0, %c0_0] : memref<8x896xbf16, #tpu.memory_space<vmem>>, vector<8x896xbf16>
    %c0_1 = arith.constant 0 : index
    %c0_2 = arith.constant 0 : index
    %1 = vector.load %arg2[%c0_1, %c0_2] : memref<896x512xbf16, #tpu.memory_space<vmem>>, vector<896x512xbf16>
    %cst = arith.constant dense<0.000000e+00> : vector<8x512xf32>
    %2 = tpu.matmul %0, %1, %cst {dimension_numbers = #tpu.dot_dimension_numbers<[1], [0], [0], [1], [0, 0, 1, 1], [], []>} : vector<8x896xbf16>, vector<896x512xbf16>, vector<8x512xf32> -> vector<8x512xf32>
    %c0_3 = arith.constant 0 : index
    %c0_4 = arith.constant 0 : index
    %3 = vector.load %arg3[%c0_3, %c0_4] : memref<1x512xf32, #tpu.memory_space<vmem>>, vector<1x512xf32>
    %4 = vector.broadcast %3 : vector<1x512xf32> to vector<8x512xf32>
    %5 = arith.addf %2, %4 : vector<8x512xf32>
    %cst_5 = arith.constant 0.000000e+00 : f32
    %6 = vector.broadcast %cst_5 : f32 to vector<8x512xf32>
    %7 = arith.maximumf %5, %6 : vector<8x512xf32>
    %8 = arith.truncf %7 : vector<8x512xf32> to vector<8x512xbf16>
    %c0_6 = arith.constant 0 : index
    %c0_7 = arith.constant 0 : index
    %9 = vector.load %arg4[%c0_6, %c0_7] : memref<512x512xbf16, #tpu.memory_space<vmem>>, vector<512x512xbf16>
    %cst_8 = arith.constant dense<0.000000e+00> : vector<8x512xf32>
    %10 = tpu.matmul %8, %9, %cst_8 {dimension_numbers = #tpu.dot_dimension_numbers<[1], [0], [0], [1], [0, 0, 1, 1], [], []>} : vector<8x512xbf16>, vector<512x512xbf16>, vector<8x512xf32> -> vector<8x512xf32>
    %c0_9 = arith.constant 0 : index
    %c0_10 = arith.constant 0 : index
    %11 = vector.load %arg5[%c0_9, %c0_10] : memref<1x512xf32, #tpu.memory_space<vmem>>, vector<1x512xf32>
    %12 = vector.broadcast %11 : vector<1x512xf32> to vector<8x512xf32>
    %13 = arith.addf %10, %12 : vector<8x512xf32>
    %cst_11 = arith.constant 0.000000e+00 : f32
    %14 = vector.broadcast %cst_11 : f32 to vector<8x512xf32>
    %15 = arith.maximumf %13, %14 : vector<8x512xf32>
    %16 = arith.truncf %15 : vector<8x512xf32> to vector<8x512xbf16>
    %c0_12 = arith.constant 0 : index
    %c0_13 = arith.constant 0 : index
    %17 = vector.load %arg6[%c0_12, %c0_13] : memref<512x128xbf16, #tpu.memory_space<vmem>>, vector<512x128xbf16>
    %cst_14 = arith.constant dense<0.000000e+00> : vector<8x128xf32>
    %18 = tpu.matmul %16, %17, %cst_14 {dimension_numbers = #tpu.dot_dimension_numbers<[1], [0], [0], [1], [0, 0, 1, 1], [], []>} : vector<8x512xbf16>, vector<512x128xbf16>, vector<8x128xf32> -> vector<8x128xf32>
    %c0_15 = arith.constant 0 : index
    %c0_16 = arith.constant 0 : index
    %19 = vector.load %arg7[%c0_15, %c0_16] : memref<1x128xf32, #tpu.memory_space<vmem>>, vector<1x128xf32>
    %20 = vector.broadcast %19 : vector<1x128xf32> to vector<8x128xf32>
    %21 = arith.addf %18, %20 : vector<8x128xf32>
    %c0_17 = arith.constant 0 : index
    %c0_18 = arith.constant 0 : index
    %22 = vector.load %arg8[%c0_17, %c0_18] : memref<8x128xf32, #tpu.memory_space<vmem>>, vector<8x128xf32>
    tpu.vector_store %arg8[%c0_17, %c0_18], %21 {strides = array<i32>} : memref<8x128xf32, #tpu.memory_space<vmem>>, vector<8x128xf32>,
    return
  }
  func.func @transform_0(%arg0: i32) -> (i32, i32) {
    %c0_i32 = arith.constant 0 : i32
    %c0_i32_0 = arith.constant 0 : i32
    return %arg0, %c0_i32 : i32, i32
  }
  func.func @transform_1(%arg0: i32) -> (i32, i32) {
    %c0_i32 = arith.constant 0 : i32
    %c0_i32_0 = arith.constant 0 : i32
    %c0_i32_1 = arith.constant 0 : i32
    return %c0_i32, %c0_i32_0 : i32, i32
  }
  func.func @transform_2(%arg0: i32) -> (i32, i32) {
    %c0_i32 = arith.constant 0 : i32
    %c0_i32_0 = arith.constant 0 : i32
    %c0_i32_1 = arith.constant 0 : i32
    return %c0_i32, %c0_i32_0 : i32, i32
  }
  func.func @transform_3(%arg0: i32) -> (i32, i32) {
    %c0_i32 = arith.constant 0 : i32
    %c0_i32_0 = arith.constant 0 : i32
    %c0_i32_1 = arith.constant 0 : i32
    return %c0_i32, %c0_i32_0 : i32, i32
  }
  func.func @transform_4(%arg0: i32) -> (i32, i32) {
    %c0_i32 = arith.constant 0 : i32
    %c0_i32_0 = arith.constant 0 : i32
    %c0_i32_1 = arith.constant 0 : i32
    return %c0_i32, %c0_i32_0 : i32, i32
  }
  func.func @transform_5(%arg0: i32) -> (i32, i32) {
    %c0_i32 = arith.constant 0 : i32
    %c0_i32_0 = arith.constant 0 : i32
    %c0_i32_1 = arith.constant 0 : i32
    return %c0_i32, %c0_i32_0 : i32, i32
  }
  func.func @transform_6(%arg0: i32) -> (i32, i32) {
    %c0_i32 = arith.constant 0 : i32
    %c0_i32_0 = arith.constant 0 : i32
    %c0_i32_1 = arith.constant 0 : i32
    return %c0_i32, %c0_i32_0 : i32, i32
  }
  func.func @transform_7(%arg0: i32) -> (i32, i32) {
    %c0_i32 = arith.constant 0 : i32
    %c0_i32_0 = arith.constant 0 : i32
    return %arg0, %c0_i32 : i32, i32
  }
}

</mosaic_0001>

<llo_original>
// kernel: neural_network_forward.1
$region0: #{neural_network_forward.1}
  #allocation0 [shape = 'u32[]', space=smem, size = 0x4, offset = 0x4, fixed_abs, tag = 'smem constant byte address 0x4 - core index']
  #allocation1 [shape = 'u32[144,128]{1,0:T(1,128)}', space=vmem, size = 0x12000, scoped, tag = 'internal scratch']
  %s0 = inlined_call_operand.vmem [shape: bf16[8,896], index: 0, kind: input, shape index: {}]
  %s1 = inlined_call_operand.hbm [shape: bf16[896,512], index: 1, kind: input, shape index: {}]
  %s2 = inlined_call_operand.vmem [shape: f32[1,512], index: 2, kind: input, shape index: {}]
  %s3 = inlined_call_operand.hbm [shape: bf16[512,512], index: 3, kind: input, shape index: {}]
  %s4 = inlined_call_operand.vmem [shape: f32[1,512], index: 4, kind: input, shape index: {}]
  %s5 = inlined_call_operand.hbm [shape: bf16[512,128], index: 5, kind: input, shape index: {}]
  %s6 = inlined_call_operand.vmem [shape: f32[1,128], index: 6, kind: input, shape index: {}]
  %s7 = inlined_call_operand.vmem [shape: f32[8,128], index: 7, kind: output, shape index: {}]
  %s8 = sld [smem:[#allocation0]]
  $region50: #{neural_network_forward.1} parent=0
    _
  %s10 = ssub.s32 1, %s8
  %s11 = scalar_select 0, %s10, %s8
  $region1: #{neural_network_forward.1} parent=0
    #allocation2 [shape = 'u8[917504]{0}', space=vmem, size = 0xe0000, scoped, tag = 'input window, operand 1, single buffered']
    #allocation3 [shape = 's32[1]{0}', space=sflag, size = 0x4, scoped, tag = 'scoped memory for neural_network_forward.1']
    #allocation4 [shape = 'u8[524288]{0}', space=vmem, size = 0x80000, scoped, tag = 'input window, operand 3, single buffered']
    #allocation5 [shape = 's32[1]{0}', space=sflag, size = 0x4, scoped, tag = 'scoped memory for neural_network_forward.1']
    #allocation6 [shape = 'u8[131072]{0}', space=vmem, size = 0x20000, scoped, tag = 'input window, operand 5, single buffered']
    %12 = vsyncpa [#allocation3], 0
    %13 = vsyncpa [#allocation5], 0
    // Predicated region
    $region2: #{neural_network_forward.1} parent=1 // pred_check
      _
    $region3: #{neural_network_forward.1} parent=1 // pred_check_branch
      %15 = sbr.rel (0) target = $region5
    $region4: #{neural_network_forward.1} parent=1 // pred_region
      _
    $region5: #{neural_network_forward.1} parent=1 // pred_fallthru
      _
    // Predicated region
    $region6: #{neural_network_forward.1} parent=1 // pred_check
      _
    $region7: #{neural_network_forward.1} parent=1 // pred_check_branch
      %17 = sbr.rel (0) target = $region9
    $region8: #{neural_network_forward.1} parent=1 // pred_region
      %s19 = ssub.s32 28672, 28672
      %20 = vsyncadd [#allocation3], %s19
      %s21 = sshll.u32 [#allocation2], 4
      %s22 = int_to_ptr.vmem [resolvable:$true] %s21
      %27 = dma.hbm_to_vmem [thread:$0]  %s1, 28672, %s22, [#allocation3], 256, 256, 16
    $region9: #{neural_network_forward.1} parent=1 // pred_fallthru
      _
    // Predicated region
    $region10: #{neural_network_forward.1} parent=1 // pred_check
      _
    $region11: #{neural_network_forward.1} parent=1 // pred_check_branch
      %29 = sbr.rel (0) target = $region13
    $region12: #{neural_network_forward.1} parent=1 // pred_region
      _
    $region13: #{neural_network_forward.1} parent=1 // pred_fallthru
      _
    // Predicated region
    $region14: #{neural_network_forward.1} parent=1 // pred_check
      _
    $region15: #{neural_network_forward.1} parent=1 // pred_check_branch
      %31 = sbr.rel (0) target = $region17
    $region16: #{neural_network_forward.1} parent=1 // pred_region
      %s33 = ssub.s32 16384, 16384
      %34 = vsyncadd [#allocation5], %s33
      %s35 = sshll.u32 [#allocation4], 4
      %s36 = int_to_ptr.vmem [resolvable:$true] %s35
      %41 = dma.hbm_to_vmem [thread:$0]  %s3, 16384, %s36, [#allocation5], 256, 256, 16
    $region17: #{neural_network_forward.1} parent=1 // pred_fallthru
      _
    // Predicated region
    $region18: #{neural_network_forward.1} parent=1 // pred_check
      _
    $region19: #{neural_network_forward.1} parent=1 // pred_check_branch
      %43 = sbr.rel (0) target = $region21
    $region20: #{neural_network_forward.1} parent=1 // pred_region
      _
    $region21: #{neural_network_forward.1} parent=1 // pred_fallthru
      _
    // Predicated region
    $region22: #{neural_network_forward.1} parent=1 // pred_check
      _
    $region23: #{neural_network_forward.1} parent=1 // pred_check_branch
      %45 = sbr.rel (0) target = $region25
    $region24: #{neural_network_forward.1} parent=1 // pred_region
      %s47 = ssub.s32 4096, 4096
      %48 = vsyncadd [#allocation5], %s47
      %s49 = sshll.u32 [#allocation6], 4
      %s50 = int_to_ptr.vmem [resolvable:$true] %s49
      %55 = dma.hbm_to_vmem [thread:$0]  %s5, 4096, %s50, [#allocation5], 64, 64, 4
    $region25: #{neural_network_forward.1} parent=1 // pred_fallthru
      _
    // Predicated region
    $region26: #{neural_network_forward.1} parent=1 // pred_check
      _
    $region27: #{neural_network_forward.1} parent=1 // pred_check_branch
      %57 = sbr.rel (0) target = $region29
    $region28: #{neural_network_forward.1} parent=1 // pred_region
      _
    $region29: #{neural_network_forward.1} parent=1 // pred_fallthru
      _
    // Predicated region
    $region30: #{neural_network_forward.1} parent=1 // pred_check
      _
    $region31: #{neural_network_forward.1} parent=1 // pred_check_branch
      %59 = sbr.rel (0) target = $region33
    $region32: #{neural_network_forward.1} parent=1 // pred_region
      %60 = dma.done [#allocation3], 28672
    $region33: #{neural_network_forward.1} parent=1 // pred_fallthru
      _
    // Predicated region
    $region34: #{neural_network_forward.1} parent=1 // pred_check
      _
    $region35: #{neural_network_forward.1} parent=1 // pred_check_branch
      %62 = sbr.rel (0) target = $region37
    $region36: #{neural_network_forward.1} parent=1 // pred_region
      %63 = dma.done [#allocation5], 16384
    $region37: #{neural_network_forward.1} parent=1 // pred_fallthru
      _
    // Predicated region
    $region38: #{neural_network_forward.1} parent=1 // pred_check
      _
    $region39: #{neural_network_forward.1} parent=1 // pred_check_branch
      %65 = sbr.rel (0) target = $region41
    $region40: #{neural_network_forward.1} parent=1 // pred_region
      %66 = dma.done [#allocation5], 4096
    $region41: #{neural_network_forward.1} parent=1 // pred_fallthru
      _
    %v68 = vld [vmem:[%s0] sm:$0xff]
    %v69 = vld [vmem:[%s0 + $0x8] sm:$0xff]
    %v70 = vld [vmem:[%s0 + $0x10] sm:$0xff]
    %v71 = vld [vmem:[%s0 + $0x18] sm:$0xf]
    %v72 = vld [vmem:[#allocation2] sm:$0xff]
    %v73 = vld [vmem:[#allocation2 + $0x8] sm:$0xff]
    %v74 = vld [vmem:[#allocation2 + $0x10] sm:$0xff]
    %v75 = vld [vmem:[#allocation2 + $0x18] sm:$0xff]
    %v76 = vld [vmem:[#allocation2 + $0x20] sm:$0xff]
    %v77 = vld [vmem:[#allocation2 + $0x28] sm:$0xff]
    %v78 = vld [vmem:[#allocation2 + $0x30] sm:$0xff]
    %v79 = vld [vmem:[#allocation2 + $0x38] sm:$0xff]
    %v80 = vld [vmem:[#allocation2 + $0x40] sm:$0xff]
    %v81 = vld [vmem:[#allocation2 + $0x48] sm:$0xff]
    %v82 = vld [vmem:[#allocation2 + $0x50] sm:$0xff]
    %v83 = vld [vmem:[#allocation2 + $0x58] sm:$0xff]
    %v84 = vld [vmem:[#allocation2 + $0x60] sm:$0xff]
    %v85 = vld [vmem:[#allocation2 + $0x68] sm:$0xff]
    %v86 = vld [vmem:[#allocation2 + $0x70] sm:$0xff]
    %v87 = vld [vmem:[#allocation2 + $0x78] sm:$0xff]
    %v88 = vld [vmem:[#allocation2 + $0x80] sm:$0xff]
    %v89 = vld [vmem:[#allocation2 + $0x88] sm:$0xff]
    %v90 = vld [vmem:[#allocation2 + $0x90] sm:$0xff]
    %v91 = vld [vmem:[#allocation2 + $0x98] sm:$0xff]
    %v92 = vld [vmem:[#allocation2 + $0xa0] sm:$0xff]
    %v93 = vld [vmem:[#allocation2 + $0xa8] sm:$0xff]
    %v94 = vld [vmem:[#allocation2 + $0xb0] sm:$0xff]
    %v95 = vld [vmem:[#allocation2 + $0xb8] sm:$0xff]
    %v96 = vld [vmem:[#allocation2 + $0xc0] sm:$0xff]
    %v97 = vld [vmem:[#allocation2 + $0xc8] sm:$0xff]
    %v98 = vld [vmem:[#allocation2 + $0xd0] sm:$0xff]
    %v99 = vld [vmem:[#allocation2 + $0xd8] sm:$0xff]
    %v100 = vld [vmem:[#allocation2 + $0xe0] sm:$0xff]
    %v101 = vld [vmem:[#allocation2 + $0xe8] sm:$0xff]
    %v102 = vld [vmem:[#allocation2 + $0xf0] sm:$0xff]
    %v103 = vld [vmem:[#allocation2 + $0xf8] sm:$0xff]
    %v104 = vld [vmem:[#allocation2 + $0x100] sm:$0xff]
    %v105 = vld [vmem:[#allocation2 + $0x108] sm:$0xff]
    %v106 = vld [vmem:[#allocation2 + $0x110] sm:$0xff]
    %v107 = vld [vmem:[#allocation2 + $0x118] sm:$0xff]
    %v108 = vld [vmem:[#allocation2 + $0x120] sm:$0xff]
    %v109 = vld [vmem:[#allocation2 + $0x128] sm:$0xff]
    %v110 = vld [vmem:[#allocation2 + $0x130] sm:$0xff]
    %v111 = vld [vmem:[#allocation2 + $0x138] sm:$0xff]
    %v112 = vld [vmem:[#allocation2 + $0x140] sm:$0xff]
    %v113 = vld [vmem:[#allocation2 + $0x148] sm:$0xff]
    %v114 = vld [vmem:[#allocation2 + $0x150] sm:$0xff]
    %v115 = vld [vmem:[#allocation2 + $0x158] sm:$0xff]
    %v116 = vld [vmem:[#allocation2 + $0x160] sm:$0xff]
    %v117 = vld [vmem:[#allocation2 + $0x168] sm:$0xff]
    %v118 = vld [vmem:[#allocation2 + $0x170] sm:$0xff]
    %v119 = vld [vmem:[#allocation2 + $0x178] sm:$0xff]
    %v120 = vld [vmem:[#allocation2 + $0x180] sm:$0xff]
    %v121 = vld [vmem:[#allocation2 + $0x188] sm:$0xff]
    %v122 = vld [vmem:[#allocation2 + $0x190] sm:$0xff]
    %v123 = vld [vmem:[#allocation2 + $0x198] sm:$0xff]
    %v124 = vld [vmem:[#allocation2 + $0x1a0] sm:$0xff]
    %v125 = vld [vmem:[#allocation2 + $0x1a8] sm:$0xff]
    %v126 = vld [vmem:[#allocation2 + $0x1b0] sm:$0xff]
    %v127 = vld [vmem:[#allocation2 + $0x1b8] sm:$0xff]
    %v128 = vld [vmem:[#allocation2 + $0x1c0] sm:$0xff]
    %v129 = vld [vmem:[#allocation2 + $0x1c8] sm:$0xff]
    %v130 = vld [vmem:[#allocation2 + $0x1d0] sm:$0xff]
    %v131 = vld [vmem:[#allocation2 + $0x1d8] sm:$0xff]
    %v132 = vld [vmem:[#allocation2 + $0x1e0] sm:$0xff]
    %v133 = vld [vmem:[#allocation2 + $0x1e8] sm:$0xff]
    %v134 = vld [vmem:[#allocation2 + $0x1f0] sm:$0xff]
    %v135 = vld [vmem:[#allocation2 + $0x1f8] sm:$0xff]
    %v136 = vld [vmem:[#allocation2 + $0x200] sm:$0xff]
    %v137 = vld [vmem:[#allocation2 + $0x208] sm:$0xff]
    %v138 = vld [vmem:[#allocation2 + $0x210] sm:$0xff]
    %v139 = vld [vmem:[#allocation2 + $0x218] sm:$0xff]
    %v140 = vld [vmem:[#allocation2 + $0x220] sm:$0xff]
    %v141 = vld [vmem:[#allocation2 + $0x228] sm:$0xff]
    %v142 = vld [vmem:[#allocation2 + $0x230] sm:$0xff]
    %v143 = vld [vmem:[#allocation2 + $0x238] sm:$0xff]
    %v144 = vld [vmem:[#allocation2 + $0x240] sm:$0xff]
    %v145 = vld [vmem:[#allocation2 + $0x248] sm:$0xff]
    %v146 = vld [vmem:[#allocation2 + $0x250] sm:$0xff]
    %v147 = vld [vmem:[#allocation2 + $0x258] sm:$0xff]
    %v148 = vld [vmem:[#allocation2 + $0x260] sm:$0xff]
    %v149 = vld [vmem:[#allocation2 + $0x268] sm:$0xff]
    %v150 = vld [vmem:[#allocation2 + $0x270] sm:$0xff]
    %v151 = vld [vmem:[#allocation2 + $0x278] sm:$0xff]
    %v152 = vld [vmem:[#allocation2 + $0x280] sm:$0xff]
    %v153 = vld [vmem:[#allocation2 + $0x288] sm:$0xff]
    %v154 = vld [vmem:[#allocation2 + $0x290] sm:$0xff]
    %v155 = vld [vmem:[#allocation2 + $0x298] sm:$0xff]
    %v156 = vld [vmem:[#allocation2 + $0x2a0] sm:$0xff]
    %v157 = vld [vmem:[#allocation2 + $0x2a8] sm:$0xff]
    %v158 = vld [vmem:[#allocation2 + $0x2b0] sm:$0xff]
    %v159 = vld [vmem:[#allocation2 + $0x2b8] sm:$0xff]
    %v160 = vld [vmem:[#allocation2 + $0x2c0] sm:$0xff]
    %v161 = vld [vmem:[#allocation2 + $0x2c8] sm:$0xff]
    %v162 = vld [vmem:[#allocation2 + $0x2d0] sm:$0xff]
    %v163 = vld [vmem:[#allocation2 + $0x2d8] sm:$0xff]
    %v164 = vld [vmem:[#allocation2 + $0x2e0] sm:$0xff]
    %v165 = vld [vmem:[#allocation2 + $0x2e8] sm:$0xff]
    %v166 = vld [vmem:[#allocation2 + $0x2f0] sm:$0xff]
    %v167 = vld [vmem:[#allocation2 + $0x2f8] sm:$0xff]
    %v168 = vld [vmem:[#allocation2 + $0x300] sm:$0xff]
    %v169 = vld [vmem:[#allocation2 + $0x308] sm:$0xff]
    %v170 = vld [vmem:[#allocation2 + $0x310] sm:$0xff]
    %v171 = vld [vmem:[#allocation2 + $0x318] sm:$0xff]
    %v172 = vld [vmem:[#allocation2 + $0x320] sm:$0xff]
    %v173 = vld [vmem:[#allocation2 + $0x328] sm:$0xff]
    %v174 = vld [vmem:[#allocation2 + $0x330] sm:$0xff]
    %v175 = vld [vmem:[#allocation2 + $0x338] sm:$0xff]
    %v176 = vld [vmem:[#allocation2 + $0x340] sm:$0xff]
    %v177 = vld [vmem:[#allocation2 + $0x348] sm:$0xff]
    %v178 = vld [vmem:[#allocation2 + $0x350] sm:$0xff]
    %v179 = vld [vmem:[#allocation2 + $0x358] sm:$0xff]
    %v180 = vld [vmem:[#allocation2 + $0x360] sm:$0xff]
    %v181 = vld [vmem:[#allocation2 + $0x368] sm:$0xff]
    %v182 = vld [vmem:[#allocation2 + $0x370] sm:$0xff]
    %v183 = vld [vmem:[#allocation2 + $0x378] sm:$0xff]
    %v184 = vld [vmem:[#allocation2 + $0x380] sm:$0xff]
    %v185 = vld [vmem:[#allocation2 + $0x388] sm:$0xff]
    %v186 = vld [vmem:[#allocation2 + $0x390] sm:$0xff]
    %v187 = vld [vmem:[#allocation2 + $0x398] sm:$0xff]
    %v188 = vld [vmem:[#allocation2 + $0x3a0] sm:$0xff]
    %v189 = vld [vmem:[#allocation2 + $0x3a8] sm:$0xff]
    %v190 = vld [vmem:[#allocation2 + $0x3b0] sm:$0xff]
    %v191 = vld [vmem:[#allocation2 + $0x3b8] sm:$0xff]
    %v192 = vld [vmem:[#allocation2 + $0x3c0] sm:$0xff]
    %v193 = vld [vmem:[#allocation2 + $0x3c8] sm:$0xff]
    %v194 = vld [vmem:[#allocation2 + $0x3d0] sm:$0xff]
    %v195 = vld [vmem:[#allocation2 + $0x3d8] sm:$0xff]
    %v196 = vld [vmem:[#allocation2 + $0x3e0] sm:$0xff]
    %v197 = vld [vmem:[#allocation2 + $0x3e8] sm:$0xff]
    %v198 = vld [vmem:[#allocation2 + $0x3f0] sm:$0xff]
    %v199 = vld [vmem:[#allocation2 + $0x3f8] sm:$0xff]
    %v200 = vld [vmem:[#allocation2 + $0x400] sm:$0xff]
    %v201 = vld [vmem:[#allocation2 + $0x408] sm:$0xff]
    %v202 = vld [vmem:[#allocation2 + $0x410] sm:$0xff]
    %v203 = vld [vmem:[#allocation2 + $0x418] sm:$0xff]
    %v204 = vld [vmem:[#allocation2 + $0x420] sm:$0xff]
    %v205 = vld [vmem:[#allocation2 + $0x428] sm:$0xff]
    %v206 = vld [vmem:[#allocation2 + $0x430] sm:$0xff]
    %v207 = vld [vmem:[#allocation2 + $0x438] sm:$0xff]
    %v208 = vld [vmem:[#allocation2 + $0x440] sm:$0xff]
    %v209 = vld [vmem:[#allocation2 + $0x448] sm:$0xff]
    %v210 = vld [vmem:[#allocation2 + $0x450] sm:$0xff]
    %v211 = vld [vmem:[#allocation2 + $0x458] sm:$0xff]
    %v212 = vld [vmem:[#allocation2 + $0x460] sm:$0xff]
    %v213 = vld [vmem:[#allocation2 + $0x468] sm:$0xff]
    %v214 = vld [vmem:[#allocation2 + $0x470] sm:$0xff]
    %v215 = vld [vmem:[#allocation2 + $0x478] sm:$0xff]
    %v216 = vld [vmem:[#allocation2 + $0x480] sm:$0xff]
    %v217 = vld [vmem:[#allocation2 + $0x488] sm:$0xff]
    %v218 = vld [vmem:[#allocation2 + $0x490] sm:$0xff]
    %v219 = vld [vmem:[#allocation2 + $0x498] sm:$0xff]
    %v220 = vld [vmem:[#allocation2 + $0x4a0] sm:$0xff]
    %v221 = vld [vmem:[#allocation2 + $0x4a8] sm:$0xff]
    %v222 = vld [vmem:[#allocation2 + $0x4b0] sm:$0xff]
    %v223 = vld [vmem:[#allocation2 + $0x4b8] sm:$0xff]
    %v224 = vld [vmem:[#allocation2 + $0x4c0] sm:$0xff]
    %v225 = vld [vmem:[#allocation2 + $0x4c8] sm:$0xff]
    %v226 = vld [vmem:[#allocation2 + $0x4d0] sm:$0xff]
    %v227 = vld [vmem:[#allocation2 + $0x4d8] sm:$0xff]
    %v228 = vld [vmem:[#allocation2 + $0x4e0] sm:$0xff]
    %v229 = vld [vmem:[#allocation2 + $0x4e8] sm:$0xff]
    %v230 = vld [vmem:[#allocation2 + $0x4f0] sm:$0xff]
    %v231 = vld [vmem:[#allocation2 + $0x4f8] sm:$0xff]
    %v232 = vld [vmem:[#allocation2 + $0x500] sm:$0xff]
    %v233 = vld [vmem:[#allocation2 + $0x508] sm:$0xff]
    %v234 = vld [vmem:[#allocation2 + $0x510] sm:$0xff]
    %v235 = vld [vmem:[#allocation2 + $0x518] sm:$0xff]
    %v236 = vld [vmem:[#allocation2 + $0x520] sm:$0xff]
    %v237 = vld [vmem:[#allocation2 + $0x528] sm:$0xff]
    %v238 = vld [vmem:[#allocation2 + $0x530] sm:$0xff]
    %v239 = vld [vmem:[#allocation2 + $0x538] sm:$0xff]
    %v240 = vld [vmem:[#allocation2 + $0x540] sm:$0xff]
    %v241 = vld [vmem:[#allocation2 + $0x548] sm:$0xff]
    %v242 = vld [vmem:[#allocation2 + $0x550] sm:$0xff]
    %v243 = vld [vmem:[#allocation2 + $0x558] sm:$0xff]
    %v244 = vld [vmem:[#allocation2 + $0x560] sm:$0xff]
    %v245 = vld [vmem:[#allocation2 + $0x568] sm:$0xff]
    %v246 = vld [vmem:[#allocation2 + $0x570] sm:$0xff]
    %v247 = vld [vmem:[#allocation2 + $0x578] sm:$0xff]
    %v248 = vld [vmem:[#allocation2 + $0x580] sm:$0xff]
    %v249 = vld [vmem:[#allocation2 + $0x588] sm:$0xff]
    %v250 = vld [vmem:[#allocation2 + $0x590] sm:$0xff]
    %v251 = vld [vmem:[#allocation2 + $0x598] sm:$0xff]
    %v252 = vld [vmem:[#allocation2 + $0x5a0] sm:$0xff]
    %v253 = vld [vmem:[#allocation2 + $0x5a8] sm:$0xff]
    %v254 = vld [vmem:[#allocation2 + $0x5b0] sm:$0xff]
    %v255 = vld [vmem:[#allocation2 + $0x5b8] sm:$0xff]
    %v256 = vld [vmem:[#allocation2 + $0x5c0] sm:$0xff]
    %v257 = vld [vmem:[#allocation2 + $0x5c8] sm:$0xff]
    %v258 = vld [vmem:[#allocation2 + $0x5d0] sm:$0xff]
    %v259 = vld [vmem:[#allocation2 + $0x5d8] sm:$0xff]
    %v260 = vld [vmem:[#allocation2 + $0x5e0] sm:$0xff]
    %v261 = vld [vmem:[#allocation2 + $0x5e8] sm:$0xff]
    %v262 = vld [vmem:[#allocation2 + $0x5f0] sm:$0xff]
    %v263 = vld [vmem:[#allocation2 + $0x5f8] sm:$0xff]
    %v264 = vld [vmem:[#allocation2 + $0x600] sm:$0xff]
    %v265 = vld [vmem:[#allocation2 + $0x608] sm:$0xff]
    %v266 = vld [vmem:[#allocation2 + $0x610] sm:$0xff]
    %v267 = vld [vmem:[#allocation2 + $0x618] sm:$0xff]
    %v268 = vld [vmem:[#allocation2 + $0x620] sm:$0xff]
    %v269 = vld [vmem:[#allocation2 + $0x628] sm:$0xff]
    %v270 = vld [vmem:[#allocation2 + $0x630] sm:$0xff]
    %v271 = vld [vmem:[#allocation2 + $0x638] sm:$0xff]
    %v272 = vld [vmem:[#allocation2 + $0x640] sm:$0xff]
    %v273 = vld [vmem:[#allocation2 + $0x648] sm:$0xff]
    %v274 = vld [vmem:[#allocation2 + $0x650] sm:$0xff]
    %v275 = vld [vmem:[#allocation2 + $0x658] sm:$0xff]
    %v276 = vld [vmem:[#allocation2 + $0x660] sm:$0xff]
    %v277 = vld [vmem:[#allocation2 + $0x668] sm:$0xff]
    %v278 = vld [vmem:[#allocation2 + $0x670] sm:$0xff]
    %v279 = vld [vmem:[#allocation2 + $0x678] sm:$0xff]
    %v280 = vld [vmem:[#allocation2 + $0x680] sm:$0xff]
    %v281 = vld [vmem:[#allocation2 + $0x688] sm:$0xff]
    %v282 = vld [vmem:[#allocation2 + $0x690] sm:$0xff]
    %v283 = vld [vmem:[#allocation2 + $0x698] sm:$0xff]
    %v284 = vld [vmem:[#allocation2 + $0x6a0] sm:$0xff]
    %v285 = vld [vmem:[#allocation2 + $0x6a8] sm:$0xff]
    %v286 = vld [vmem:[#allocation2 + $0x6b0] sm:$0xff]
    %v287 = vld [vmem:[#allocation2 + $0x6b8] sm:$0xff]
    %v288 = vld [vmem:[#allocation2 + $0x6c0] sm:$0xff]
    %v289 = vld [vmem:[#allocation2 + $0x6c8] sm:$0xff]
    %v290 = vld [vmem:[#allocation2 + $0x6d0] sm:$0xff]
    %v291 = vld [vmem:[#allocation2 + $0x6d8] sm:$0xff]
    %v292 = vld [vmem:[#allocation2 + $0x6e0] sm:$0xff]
    %v293 = vld [vmem:[#allocation2 + $0x6e8] sm:$0xff]
    %v294 = vld [vmem:[#allocation2 + $0x6f0] sm:$0xff]
    %v295 = vld [vmem:[#allocation2 + $0x6f8] sm:$0xff]
    %v296 = vld [vmem:[%s2] sm:$0xf]
    %v298 = vlaneseq
    %v299 = vshrl.u32 %v298, 7
    %v300 = vsub.s32 0, %v299
    %v301 = vrot.slane %v296, %v300
    %v302 = vlaneseq
    %v303 = vshrl.u32 %v302, 7
    %v304 = vsub.s32 1, %v303
    %v305 = vrot.slane %v296, %v304
    %v306 = vlaneseq
    %v307 = vshrl.u32 %v306, 7
    %v308 = vsub.s32 2, %v307
    %v309 = vrot.slane %v296, %v308
    %v310 = vlaneseq
    %v311 = vshrl.u32 %v310, 7
    %v312 = vsub.s32 3, %v311
    %v313 = vrot.slane %v296, %v312
    %v322 = vunpack.c.l.b16 %v68
    %v323 = vunpack.c.h.b16 %v68
    %v324 = vunpack.c.l.b16 %v69
    %v325 = vunpack.c.h.b16 %v69
    %v326 = vunpack.c.l.b16 %v70
    %v327 = vunpack.c.h.b16 %v70
    %v328 = vunpack.c.l.b16 %v71
    %v329 = vpack.c.b16 %v322, %v322
    %v330 = vpack.c.b16 %v323, %v323
    %v331 = vpack.c.b16 %v324, %v324
    %v332 = vpack.c.b16 %v325, %v325
    %v333 = vpack.c.b16 %v326, %v326
    %v334 = vpack.c.b16 %v327, %v327
    %v335 = vpack.c.b16 %v328, %v328
    %v567 = vunpack.c.l.b16 %v72
    %v568 = vunpack.c.h.b16 %v72
    %v569 = vunpack.c.l.b16 %v73
    %v570 = vunpack.c.h.b16 %v73
    %v571 = vunpack.c.l.b16 %v74
    %v572 = vunpack.c.h.b16 %v74
    %v573 = vunpack.c.l.b16 %v75
    %v574 = vunpack.c.h.b16 %v75
    %v575 = vunpack.c.l.b16 %v76
    %v576 = vunpack.c.h.b16 %v76
    %v577 = vunpack.c.l.b16 %v77
    %v578 = vunpack.c.h.b16 %v77
    %v579 = vunpack.c.l.b16 %v78
    %v580 = vunpack.c.h.b16 %v78
    %v581 = vunpack.c.l.b16 %v79
    %v582 = vunpack.c.h.b16 %v79
    %v583 = vunpack.c.l.b16 %v80
    %v584 = vunpack.c.h.b16 %v80
    %v585 = vunpack.c.l.b16 %v81
    %v586 = vunpack.c.h.b16 %v81
    %v587 = vunpack.c.l.b16 %v82
    %v588 = vunpack.c.h.b16 %v82
    %v589 = vunpack.c.l.b16 %v83
    %v590 = vunpack.c.h.b16 %v83
    %v591 = vunpack.c.l.b16 %v84
    %v592 = vunpack.c.h.b16 %v84
    %v593 = vunpack.c.l.b16 %v85
    %v594 = vunpack.c.h.b16 %v85
    %v595 = vunpack.c.l.b16 %v86
    %v596 = vunpack.c.h.b16 %v86
    %v597 = vunpack.c.l.b16 %v87
    %v598 = vunpack.c.h.b16 %v87
    %v599 = vunpack.c.l.b16 %v88
    %v600 = vunpack.c.h.b16 %v88
    %v601 = vunpack.c.l.b16 %v89
    %v602 = vunpack.c.h.b16 %v89
    %v603 = vunpack.c.l.b16 %v90
    %v604 = vunpack.c.h.b16 %v90
    %v605 = vunpack.c.l.b16 %v91
    %v606 = vunpack.c.h.b16 %v91
    %v607 = vunpack.c.l.b16 %v92
    %v608 = vunpack.c.h.b16 %v92
    %v609 = vunpack.c.l.b16 %v93
    %v610 = vunpack.c.h.b16 %v93
    %v611 = vunpack.c.l.b16 %v94
    %v612 = vunpack.c.h.b16 %v94
    %v613 = vunpack.c.l.b16 %v95
    %v614 = vunpack.c.h.b16 %v95
    %v615 = vunpack.c.l.b16 %v96
    %v616 = vunpack.c.h.b16 %v96
    %v617 = vunpack.c.l.b16 %v97
    %v618 = vunpack.c.h.b16 %v97
    %v619 = vunpack.c.l.b16 %v98
    %v620 = vunpack.c.h.b16 %v98
    %v621 = vunpack.c.l.b16 %v99
    %v622 = vunpack.c.h.b16 %v99
    %v623 = vunpack.c.l.b16 %v100
    %v624 = vunpack.c.h.b16 %v100
    %v625 = vunpack.c.l.b16 %v101
    %v626 = vunpack.c.h.b16 %v101
    %v627 = vunpack.c.l.b16 %v102
    %v628 = vunpack.c.h.b16 %v102
    %v629 = vunpack.c.l.b16 %v103
    %v630 = vunpack.c.h.b16 %v103
    %v631 = vunpack.c.l.b16 %v104
    %v632 = vunpack.c.h.b16 %v104
    %v633 = vunpack.c.l.b16 %v105
    %v634 = vunpack.c.h.b16 %v105
    %v635 = vunpack.c.l.b16 %v106
    %v636 = vunpack.c.h.b16 %v106
    %v637 = vunpack.c.l.b16 %v107
    %v638 = vunpack.c.h.b16 %v107
    %v639 = vunpack.c.l.b16 %v108
    %v640 = vunpack.c.h.b16 %v108
    %v641 = vunpack.c.l.b16 %v109
    %v642 = vunpack.c.h.b16 %v109
    %v643 = vunpack.c.l.b16 %v110
    %v644 = vunpack.c.h.b16 %v110
    %v645 = vunpack.c.l.b16 %v111
    %v646 = vunpack.c.h.b16 %v111
    %v647 = vunpack.c.l.b16 %v112
    %v648 = vunpack.c.h.b16 %v112
    %v649 = vunpack.c.l.b16 %v113
    %v650 = vunpack.c.h.b16 %v113
    %v651 = vunpack.c.l.b16 %v114
    %v652 = vunpack.c.h.b16 %v114
    %v653 = vunpack.c.l.b16 %v115
    %v654 = vunpack.c.h.b16 %v115
    %v655 = vunpack.c.l.b16 %v116
    %v656 = vunpack.c.h.b16 %v116
    %v657 = vunpack.c.l.b16 %v117
    %v658 = vunpack.c.h.b16 %v117
    %v659 = vunpack.c.l.b16 %v118
    %v660 = vunpack.c.h.b16 %v118
    %v661 = vunpack.c.l.b16 %v119
    %v662 = vunpack.c.h.b16 %v119
    %v663 = vunpack.c.l.b16 %v120
    %v664 = vunpack.c.h.b16 %v120
    %v665 = vunpack.c.l.b16 %v121
    %v666 = vunpack.c.h.b16 %v121
    %v667 = vunpack.c.l.b16 %v122
    %v668 = vunpack.c.h.b16 %v122
    %v669 = vunpack.c.l.b16 %v123
    %v670 = vunpack.c.h.b16 %v123
    %v671 = vunpack.c.l.b16 %v124
    %v672 = vunpack.c.h.b16 %v124
    %v673 = vunpack.c.l.b16 %v125
    %v674 = vunpack.c.h.b16 %v125
    %v675 = vunpack.c.l.b16 %v126
    %v676 = vunpack.c.h.b16 %v126
    %v677 = vunpack.c.l.b16 %v127
    %v678 = vunpack.c.h.b16 %v127
    %v679 = vunpack.c.l.b16 %v128
    %v680 = vunpack.c.h.b16 %v128
    %v681 = vunpack.c.l.b16 %v129
    %v682 = vunpack.c.h.b16 %v129
    %v683 = vunpack.c.l.b16 %v130
    %v684 = vunpack.c.h.b16 %v130
    %v685 = vunpack.c.l.b16 %v131
    %v686 = vunpack.c.h.b16 %v131
    %v687 = vunpack.c.l.b16 %v132
    %v688 = vunpack.c.h.b16 %v132
    %v689 = vunpack.c.l.b16 %v133
    %v690 = vunpack.c.h.b16 %v133
    %v691 = vunpack.c.l.b16 %v134
    %v692 = vunpack.c.h.b16 %v134
    %v693 = vunpack.c.l.b16 %v135
    %v694 = vunpack.c.h.b16 %v135
    %v695 = vunpack.c.l.b16 %v136
    %v696 = vunpack.c.h.b16 %v136
    %v697 = vunpack.c.l.b16 %v137
    %v698 = vunpack.c.h.b16 %v137
    %v699 = vunpack.c.l.b16 %v138
    %v700 = vunpack.c.h.b16 %v138
    %v701 = vunpack.c.l.b16 %v139
    %v702 = vunpack.c.h.b16 %v139
    %v703 = vunpack.c.l.b16 %v140
    %v704 = vunpack.c.h.b16 %v140
    %v705 = vunpack.c.l.b16 %v141
    %v706 = vunpack.c.h.b16 %v141
    %v707 = vunpack.c.l.b16 %v142
    %v708 = vunpack.c.h.b16 %v142
    %v709 = vunpack.c.l.b16 %v143
    %v710 = vunpack.c.h.b16 %v143
    %v711 = vunpack.c.l.b16 %v144
    %v712 = vunpack.c.h.b16 %v144
    %v713 = vunpack.c.l.b16 %v145
    %v714 = vunpack.c.h.b16 %v145
    %v715 = vunpack.c.l.b16 %v146
    %v716 = vunpack.c.h.b16 %v146
    %v717 = vunpack.c.l.b16 %v147
    %v718 = vunpack.c.h.b16 %v147
    %v719 = vunpack.c.l.b16 %v148
    %v720 = vunpack.c.h.b16 %v148
    %v721 = vunpack.c.l.b16 %v149
    %v722 = vunpack.c.h.b16 %v149
    %v723 = vunpack.c.l.b16 %v150
    %v724 = vunpack.c.h.b16 %v150
    %v725 = vunpack.c.l.b16 %v151
    %v726 = vunpack.c.h.b16 %v151
    %v727 = vunpack.c.l.b16 %v152
    %v728 = vunpack.c.h.b16 %v152
    %v729 = vunpack.c.l.b16 %v153
    %v730 = vunpack.c.h.b16 %v153
    %v731 = vunpack.c.l.b16 %v154
    %v732 = vunpack.c.h.b16 %v154
    %v733 = vunpack.c.l.b16 %v155
    %v734 = vunpack.c.h.b16 %v155
    %v735 = vunpack.c.l.b16 %v156
    %v736 = vunpack.c.h.b16 %v156
    %v737 = vunpack.c.l.b16 %v157
    %v738 = vunpack.c.h.b16 %v157
    %v739 = vunpack.c.l.b16 %v158
    %v740 = vunpack.c.h.b16 %v158
    %v741 = vunpack.c.l.b16 %v159
    %v742 = vunpack.c.h.b16 %v159
    %v743 = vunpack.c.l.b16 %v160
    %v744 = vunpack.c.h.b16 %v160
    %v745 = vunpack.c.l.b16 %v161
    %v746 = vunpack.c.h.b16 %v161
    %v747 = vunpack.c.l.b16 %v162
    %v748 = vunpack.c.h.b16 %v162
    %v749 = vunpack.c.l.b16 %v163
    %v750 = vunpack.c.h.b16 %v163
    %v751 = vunpack.c.l.b16 %v164
    %v752 = vunpack.c.h.b16 %v164
    %v753 = vunpack.c.l.b16 %v165
    %v754 = vunpack.c.h.b16 %v165
    %v755 = vunpack.c.l.b16 %v166
    %v756 = vunpack.c.h.b16 %v166
    %v757 = vunpack.c.l.b16 %v167
    %v758 = vunpack.c.h.b16 %v167
    %v759 = vunpack.c.l.b16 %v168
    %v760 = vunpack.c.h.b16 %v168
    %v761 = vunpack.c.l.b16 %v169
    %v762 = vunpack.c.h.b16 %v169
    %v763 = vunpack.c.l.b16 %v170
    %v764 = vunpack.c.h.b16 %v170
    %v765 = vunpack.c.l.b16 %v171
    %v766 = vunpack.c.h.b16 %v171
    %v767 = vunpack.c.l.b16 %v172
    %v768 = vunpack.c.h.b16 %v172
    %v769 = vunpack.c.l.b16 %v173
    %v770 = vunpack.c.h.b16 %v173
    %v771 = vunpack.c.l.b16 %v174
    %v772 = vunpack.c.h.b16 %v174
    %v773 = vunpack.c.l.b16 %v175
    %v774 = vunpack.c.h.b16 %v175
    %v775 = vunpack.c.l.b16 %v176
    %v776 = vunpack.c.h.b16 %v176
    %v777 = vunpack.c.l.b16 %v177
    %v778 = vunpack.c.h.b16 %v177
    %v779 = vunpack.c.l.b16 %v178
    %v780 = vunpack.c.h.b16 %v178
    %v781 = vunpack.c.l.b16 %v179
    %v782 = vunpack.c.h.b16 %v179
    %v783 = vunpack.c.l.b16 %v180
    %v784 = vunpack.c.h.b16 %v180
    %v785 = vunpack.c.l.b16 %v181
    %v786 = vunpack.c.h.b16 %v181
    %v787 = vunpack.c.l.b16 %v182
    %v788 = vunpack.c.h.b16 %v182
    %v789 = vunpack.c.l.b16 %v183
    %v790 = vunpack.c.h.b16 %v183
    %v791 = vunpack.c.l.b16 %v184
    %v792 = vunpack.c.h.b16 %v184
    %v793 = vunpack.c.l.b16 %v185
    %v794 = vunpack.c.h.b16 %v185
    %v795 = vunpack.c.l.b16 %v186
    %v796 = vunpack.c.h.b16 %v186
    %v797 = vunpack.c.l.b16 %v187
    %v798 = vunpack.c.h.b16 %v187
    %v799 = vunpack.c.l.b16 %v188
    %v800 = vunpack.c.h.b16 %v188
    %v801 = vunpack.c.l.b16 %v189
    %v802 = vunpack.c.h.b16 %v189
    %v803 = vunpack.c.l.b16 %v190
    %v804 = vunpack.c.h.b16 %v190
    %v805 = vunpack.c.l.b16 %v191
    %v806 = vunpack.c.h.b16 %v191
    %v807 = vunpack.c.l.b16 %v192
    %v808 = vunpack.c.h.b16 %v192
    %v809 = vunpack.c.l.b16 %v193
    %v810 = vunpack.c.h.b16 %v193
    %v811 = vunpack.c.l.b16 %v194
    %v812 = vunpack.c.h.b16 %v194
    %v813 = vunpack.c.l.b16 %v195
    %v814 = vunpack.c.h.b16 %v195
    %v815 = vunpack.c.l.b16 %v196
    %v816 = vunpack.c.h.b16 %v196
    %v817 = vunpack.c.l.b16 %v197
    %v818 = vunpack.c.h.b16 %v197
    %v819 = vunpack.c.l.b16 %v198
    %v820 = vunpack.c.h.b16 %v198
    %v821 = vunpack.c.l.b16 %v199
    %v822 = vunpack.c.h.b16 %v199
    %v823 = vunpack.c.l.b16 %v200
    %v824 = vunpack.c.h.b16 %v200
    %v825 = vunpack.c.l.b16 %v201
    %v826 = vunpack.c.h.b16 %v201
    %v827 = vunpack.c.l.b16 %v202
    %v828 = vunpack.c.h.b16 %v202
    %v829 = vunpack.c.l.b16 %v203
    %v830 = vunpack.c.h.b16 %v203
    %v831 = vunpack.c.l.b16 %v204
    %v832 = vunpack.c.h.b16 %v204
    %v833 = vunpack.c.l.b16 %v205
    %v834 = vunpack.c.h.b16 %v205
    %v835 = vunpack.c.l.b16 %v206
    %v836 = vunpack.c.h.b16 %v206
    %v837 = vunpack.c.l.b16 %v207
    %v838 = vunpack.c.h.b16 %v207
    %v839 = vunpack.c.l.b16 %v208
    %v840 = vunpack.c.h.b16 %v208
    %v841 = vunpack.c.l.b16 %v209
    %v842 = vunpack.c.h.b16 %v209
    %v843 = vunpack.c.l.b16 %v210
    %v844 = vunpack.c.h.b16 %v210
    %v845 = vunpack.c.l.b16 %v211
    %v846 = vunpack.c.h.b16 %v211
    %v847 = vunpack.c.l.b16 %v212
    %v848 = vunpack.c.h.b16 %v212
    %v849 = vunpack.c.l.b16 %v213
    %v850 = vunpack.c.h.b16 %v213
    %v851 = vunpack.c.l.b16 %v214
    %v852 = vunpack.c.h.b16 %v214
    %v853 = vunpack.c.l.b16 %v215
    %v854 = vunpack.c.h.b16 %v215
    %v855 = vunpack.c.l.b16 %v216
    %v856 = vunpack.c.h.b16 %v216
    %v857 = vunpack.c.l.b16 %v217
    %v858 = vunpack.c.h.b16 %v217
    %v859 = vunpack.c.l.b16 %v218
    %v860 = vunpack.c.h.b16 %v218
    %v861 = vunpack.c.l.b16 %v219
    %v862 = vunpack.c.h.b16 %v219
    %v863 = vunpack.c.l.b16 %v220
    %v864 = vunpack.c.h.b16 %v220
    %v865 = vunpack.c.l.b16 %v221
    %v866 = vunpack.c.h.b16 %v221
    %v867 = vunpack.c.l.b16 %v222
    %v868 = vunpack.c.h.b16 %v222
    %v869 = vunpack.c.l.b16 %v223
    %v870 = vunpack.c.h.b16 %v223
    %v871 = vunpack.c.l.b16 %v224
    %v872 = vunpack.c.h.b16 %v224
    %v873 = vunpack.c.l.b16 %v225
    %v874 = vunpack.c.h.b16 %v225
    %v875 = vunpack.c.l.b16 %v226
    %v876 = vunpack.c.h.b16 %v226
    %v877 = vunpack.c.l.b16 %v227
    %v878 = vunpack.c.h.b16 %v227
    %v879 = vunpack.c.l.b16 %v228
    %v880 = vunpack.c.h.b16 %v228
    %v881 = vunpack.c.l.b16 %v229
    %v882 = vunpack.c.h.b16 %v229
    %v883 = vunpack.c.l.b16 %v230
    %v884 = vunpack.c.h.b16 %v230
    %v885 = vunpack.c.l.b16 %v231
    %v886 = vunpack.c.h.b16 %v231
    %v887 = vunpack.c.l.b16 %v232
    %v888 = vunpack.c.h.b16 %v232
    %v889 = vunpack.c.l.b16 %v233
    %v890 = vunpack.c.h.b16 %v233
    %v891 = vunpack.c.l.b16 %v234
    %v892 = vunpack.c.h.b16 %v234
    %v893 = vunpack.c.l.b16 %v235
    %v894 = vunpack.c.h.b16 %v235
    %v895 = vunpack.c.l.b16 %v236
    %v896 = vunpack.c.h.b16 %v236
    %v897 = vunpack.c.l.b16 %v237
    %v898 = vunpack.c.h.b16 %v237
    %v899 = vunpack.c.l.b16 %v238
    %v900 = vunpack.c.h.b16 %v238
    %v901 = vunpack.c.l.b16 %v239
    %v902 = vunpack.c.h.b16 %v239
    %v903 = vunpack.c.l.b16 %v240
    %v904 = vunpack.c.h.b16 %v240
    %v905 = vunpack.c.l.b16 %v241
    %v906 = vunpack.c.h.b16 %v241
    %v907 = vunpack.c.l.b16 %v242
    %v908 = vunpack.c.h.b16 %v242
    %v909 = vunpack.c.l.b16 %v243
    %v910 = vunpack.c.h.b16 %v243
    %v911 = vunpack.c.l.b16 %v244
    %v912 = vunpack.c.h.b16 %v244
    %v913 = vunpack.c.l.b16 %v245
    %v914 = vunpack.c.h.b16 %v245
    %v915 = vunpack.c.l.b16 %v246
    %v916 = vunpack.c.h.b16 %v246
    %v917 = vunpack.c.l.b16 %v247
    %v918 = vunpack.c.h.b16 %v247
    %v919 = vunpack.c.l.b16 %v248
    %v920 = vunpack.c.h.b16 %v248
    %v921 = vunpack.c.l.b16 %v249
    %v922 = vunpack.c.h.b16 %v249
    %v923 = vunpack.c.l.b16 %v250
    %v924 = vunpack.c.h.b16 %v250
    %v925 = vunpack.c.l.b16 %v251
    %v926 = vunpack.c.h.b16 %v251
    %v927 = vunpack.c.l.b16 %v252
    %v928 = vunpack.c.h.b16 %v252
    %v929 = vunpack.c.l.b16 %v253
    %v930 = vunpack.c.h.b16 %v253
    %v931 = vunpack.c.l.b16 %v254
    %v932 = vunpack.c.h.b16 %v254
    %v933 = vunpack.c.l.b16 %v255
    %v934 = vunpack.c.h.b16 %v255
    %v935 = vunpack.c.l.b16 %v256
    %v936 = vunpack.c.h.b16 %v256
    %v937 = vunpack.c.l.b16 %v257
    %v938 = vunpack.c.h.b16 %v257
    %v939 = vunpack.c.l.b16 %v258
    %v940 = vunpack.c.h.b16 %v258
    %v941 = vunpack.c.l.b16 %v259
    %v942 = vunpack.c.h.b16 %v259
    %v943 = vunpack.c.l.b16 %v260
    %v944 = vunpack.c.h.b16 %v260
    %v945 = vunpack.c.l.b16 %v261
    %v946 = vunpack.c.h.b16 %v261
    %v947 = vunpack.c.l.b16 %v262
    %v948 = vunpack.c.h.b16 %v262
    %v949 = vunpack.c.l.b16 %v263
    %v950 = vunpack.c.h.b16 %v263
    %v951 = vunpack.c.l.b16 %v264
    %v952 = vunpack.c.h.b16 %v264
    %v953 = vunpack.c.l.b16 %v265
    %v954 = vunpack.c.h.b16 %v265
    %v955 = vunpack.c.l.b16 %v266
    %v956 = vunpack.c.h.b16 %v266
    %v957 = vunpack.c.l.b16 %v267
    %v958 = vunpack.c.h.b16 %v267
    %v959 = vunpack.c.l.b16 %v268
    %v960 = vunpack.c.h.b16 %v268
    %v961 = vunpack.c.l.b16 %v269
    %v962 = vunpack.c.h.b16 %v269
    %v963 = vunpack.c.l.b16 %v270
    %v964 = vunpack.c.h.b16 %v270
    %v965 = vunpack.c.l.b16 %v271
    %v966 = vunpack.c.h.b16 %v271
    %v967 = vunpack.c.l.b16 %v272
    %v968 = vunpack.c.h.b16 %v272
    %v969 = vunpack.c.l.b16 %v273
    %v970 = vunpack.c.h.b16 %v273
    %v971 = vunpack.c.l.b16 %v274
    %v972 = vunpack.c.h.b16 %v274
    %v973 = vunpack.c.l.b16 %v275
    %v974 = vunpack.c.h.b16 %v275
    %v975 = vunpack.c.l.b16 %v276
    %v976 = vunpack.c.h.b16 %v276
    %v977 = vunpack.c.l.b16 %v277
    %v978 = vunpack.c.h.b16 %v277
    %v979 = vunpack.c.l.b16 %v278
    %v980 = vunpack.c.h.b16 %v278
    %v981 = vunpack.c.l.b16 %v279
    %v982 = vunpack.c.h.b16 %v279
    %v983 = vunpack.c.l.b16 %v280
    %v984 = vunpack.c.h.b16 %v280
    %v985 = vunpack.c.l.b16 %v281
    %v986 = vunpack.c.h.b16 %v281
    %v987 = vunpack.c.l.b16 %v282
    %v988 = vunpack.c.h.b16 %v282
    %v989 = vunpack.c.l.b16 %v283
    %v990 = vunpack.c.h.b16 %v283
    %v991 = vunpack.c.l.b16 %v284
    %v992 = vunpack.c.h.b16 %v284
    %v993 = vunpack.c.l.b16 %v285
    %v994 = vunpack.c.h.b16 %v285
    %v995 = vunpack.c.l.b16 %v286
    %v996 = vunpack.c.h.b16 %v286
    %v997 = vunpack.c.l.b16 %v287
    %v998 = vunpack.c.h.b16 %v287
    %v999 = vunpack.c.l.b16 %v288
    %v1000 = vunpack.c.h.b16 %v288
    %v1001 = vunpack.c.l.b16 %v289
    %v1002 = vunpack.c.h.b16 %v289
    %v1003 = vunpack.c.l.b16 %v290
    %v1004 = vunpack.c.h.b16 %v290
    %v1005 = vunpack.c.l.b16 %v291
    %v1006 = vunpack.c.h.b16 %v291
    %v1007 = vunpack.c.l.b16 %v292
    %v1008 = vunpack.c.h.b16 %v292
    %v1009 = vunpack.c.l.b16 %v293
    %v1010 = vunpack.c.h.b16 %v293
    %v1011 = vunpack.c.l.b16 %v294
    %v1012 = vunpack.c.h.b16 %v294
    %v1013 = vunpack.c.l.b16 %v295
    %v1014 = vunpack.c.h.b16 %v295
    %v1015 = vpack.c.b16 %v571, %v567
    %v1016 = vpack.c.b16 %v572, %v568
    %v1017 = vpack.c.b16 %v573, %v569
    %v1018 = vpack.c.b16 %v574, %v570
    %v1019 = vpack.c.b16 %v579, %v575
    %v1020 = vpack.c.b16 %v580, %v576
    %v1021 = vpack.c.b16 %v581, %v577
    %v1022 = vpack.c.b16 %v582, %v578
    %v1023 = vpack.c.b16 %v587, %v583
    %v1024 = vpack.c.b16 %v588, %v584
    %v1025 = vpack.c.b16 %v589, %v585
    %v1026 = vpack.c.b16 %v590, %v586
    %v1027 = vpack.c.b16 %v595, %v591
    %v1028 = vpack.c.b16 %v596, %v592
    %v1029 = vpack.c.b16 %v597, %v593
    %v1030 = vpack.c.b16 %v598, %v594
    %v1031 = vpack.c.b16 %v603, %v599
    %v1032 = vpack.c.b16 %v604, %v600
    %v1033 = vpack.c.b16 %v605, %v601
    %v1034 = vpack.c.b16 %v606, %v602
    %v1035 = vpack.c.b16 %v611, %v607
    %v1036 = vpack.c.b16 %v612, %v608
    %v1037 = vpack.c.b16 %v613, %v609
    %v1038 = vpack.c.b16 %v614, %v610
    %v1039 = vpack.c.b16 %v619, %v615
    %v1040 = vpack.c.b16 %v620, %v616
    %v1041 = vpack.c.b16 %v621, %v617
    %v1042 = vpack.c.b16 %v622, %v618
    %v1043 = vpack.c.b16 %v627, %v623
    %v1044 = vpack.c.b16 %v628, %v624
    %v1045 = vpack.c.b16 %v629, %v625
    %v1046 = vpack.c.b16 %v630, %v626
    %v1047 = vpack.c.b16 %v635, %v631
    %v1048 = vpack.c.b16 %v636, %v632
    %v1049 = vpack.c.b16 %v637, %v633
    %v1050 = vpack.c.b16 %v638, %v634
    %v1051 = vpack.c.b16 %v643, %v639
    %v1052 = vpack.c.b16 %v644, %v640
    %v1053 = vpack.c.b16 %v645, %v641
    %v1054 = vpack.c.b16 %v646, %v642
    %v1055 = vpack.c.b16 %v651, %v647
    %v1056 = vpack.c.b16 %v652, %v648
    %v1057 = vpack.c.b16 %v653, %v649
    %v1058 = vpack.c.b16 %v654, %v650
    %v1059 = vpack.c.b16 %v659, %v655
    %v1060 = vpack.c.b16 %v660, %v656
    %v1061 = vpack.c.b16 %v661, %v657
    %v1062 = vpack.c.b16 %v662, %v658
    %v1063 = vpack.c.b16 %v667, %v663
    %v1064 = vpack.c.b16 %v668, %v664
    %v1065 = vpack.c.b16 %v669, %v665
    %v1066 = vpack.c.b16 %v670, %v666
    %v1067 = vpack.c.b16 %v675, %v671
    %v1068 = vpack.c.b16 %v676, %v672
    %v1069 = vpack.c.b16 %v677, %v673
    %v1070 = vpack.c.b16 %v678, %v674
    %v1071 = vpack.c.b16 %v683, %v679
    %v1072 = vpack.c.b16 %v684, %v680
    %v1073 = vpack.c.b16 %v685, %v681
    %v1074 = vpack.c.b16 %v686, %v682
    %v1075 = vpack.c.b16 %v691, %v687
    %v1076 = vpack.c.b16 %v692, %v688
    %v1077 = vpack.c.b16 %v693, %v689
    %v1078 = vpack.c.b16 %v694, %v690
    %v1079 = vpack.c.b16 %v699, %v695
    %v1080 = vpack.c.b16 %v700, %v696
    %v1081 = vpack.c.b16 %v701, %v697
    %v1082 = vpack.c.b16 %v702, %v698
    %v1083 = vpack.c.b16 %v707, %v703
    %v1084 = vpack.c.b16 %v708, %v704
    %v1085 = vpack.c.b16 %v709, %v705
    %v1086 = vpack.c.b16 %v710, %v706
    %v1087 = vpack.c.b16 %v715, %v711
    %v1088 = vpack.c.b16 %v716, %v712
    %v1089 = vpack.c.b16 %v717, %v713
    %v1090 = vpack.c.b16 %v718, %v714
    %v1091 = vpack.c.b16 %v723, %v719
    %v1092 = vpack.c.b16 %v724, %v720
    %v1093 = vpack.c.b16 %v725, %v721
    %v1094 = vpack.c.b16 %v726, %v722
    %v1095 = vpack.c.b16 %v731, %v727
    %v1096 = vpack.c.b16 %v732, %v728
    %v1097 = vpack.c.b16 %v733, %v729
    %v1098 = vpack.c.b16 %v734, %v730
    %v1099 = vpack.c.b16 %v739, %v735
    %v1100 = vpack.c.b16 %v740, %v736
    %v1101 = vpack.c.b16 %v741, %v737
    %v1102 = vpack.c.b16 %v742, %v738
    %v1103 = vpack.c.b16 %v747, %v743
    %v1104 = vpack.c.b16 %v748, %v744
    %v1105 = vpack.c.b16 %v749, %v745
    %v1106 = vpack.c.b16 %v750, %v746
    %v1107 = vpack.c.b16 %v755, %v751
    %v1108 = vpack.c.b16 %v756, %v752
    %v1109 = vpack.c.b16 %v757, %v753
    %v1110 = vpack.c.b16 %v758, %v754
    %v1111 = vpack.c.b16 %v763, %v759
    %v1112 = vpack.c.b16 %v764, %v760
    %v1113 = vpack.c.b16 %v765, %v761
    %v1114 = vpack.c.b16 %v766, %v762
    %v1115 = vpack.c.b16 %v771, %v767
    %v1116 = vpack.c.b16 %v772, %v768
    %v1117 = vpack.c.b16 %v773, %v769
    %v1118 = vpack.c.b16 %v774, %v770
    %v1119 = vpack.c.b16 %v779, %v775
    %v1120 = vpack.c.b16 %v780, %v776
    %v1121 = vpack.c.b16 %v781, %v777
    %v1122 = vpack.c.b16 %v782, %v778
    %v1123 = vpack.c.b16 %v787, %v783
    %v1124 = vpack.c.b16 %v788, %v784
    %v1125 = vpack.c.b16 %v789, %v785
    %v1126 = vpack.c.b16 %v790, %v786
    %v1127 = vpack.c.b16 %v795, %v791
    %v1128 = vpack.c.b16 %v796, %v792
    %v1129 = vpack.c.b16 %v797, %v793
    %v1130 = vpack.c.b16 %v798, %v794
    %v1131 = vpack.c.b16 %v803, %v799
    %v1132 = vpack.c.b16 %v804, %v800
    %v1133 = vpack.c.b16 %v805, %v801
    %v1134 = vpack.c.b16 %v806, %v802
    %v1135 = vpack.c.b16 %v811, %v807
    %v1136 = vpack.c.b16 %v812, %v808
    %v1137 = vpack.c.b16 %v813, %v809
    %v1138 = vpack.c.b16 %v814, %v810
    %v1139 = vpack.c.b16 %v819, %v815
    %v1140 = vpack.c.b16 %v820, %v816
    %v1141 = vpack.c.b16 %v821, %v817
    %v1142 = vpack.c.b16 %v822, %v818
    %v1143 = vpack.c.b16 %v827, %v823
    %v1144 = vpack.c.b16 %v828, %v824
    %v1145 = vpack.c.b16 %v829, %v825
    %v1146 = vpack.c.b16 %v830, %v826
    %v1147 = vpack.c.b16 %v835, %v831
    %v1148 = vpack.c.b16 %v836, %v832
    %v1149 = vpack.c.b16 %v837, %v833
    %v1150 = vpack.c.b16 %v838, %v834
    %v1151 = vpack.c.b16 %v843, %v839
    %v1152 = vpack.c.b16 %v844, %v840
    %v1153 = vpack.c.b16 %v845, %v841
    %v1154 = vpack.c.b16 %v846, %v842
    %v1155 = vpack.c.b16 %v851, %v847
    %v1156 = vpack.c.b16 %v852, %v848
    %v1157 = vpack.c.b16 %v853, %v849
    %v1158 = vpack.c.b16 %v854, %v850
    %v1159 = vpack.c.b16 %v859, %v855
    %v1160 = vpack.c.b16 %v860, %v856
    %v1161 = vpack.c.b16 %v861, %v857
    %v1162 = vpack.c.b16 %v862, %v858
    %v1163 = vpack.c.b16 %v867, %v863
    %v1164 = vpack.c.b16 %v868, %v864
    %v1165 = vpack.c.b16 %v869, %v865
    %v1166 = vpack.c.b16 %v870, %v866
    %v1167 = vpack.c.b16 %v875, %v871
    %v1168 = vpack.c.b16 %v876, %v872
    %v1169 = vpack.c.b16 %v877, %v873
    %v1170 = vpack.c.b16 %v878, %v874
    %v1171 = vpack.c.b16 %v883, %v879
    %v1172 = vpack.c.b16 %v884, %v880
    %v1173 = vpack.c.b16 %v885, %v881
    %v1174 = vpack.c.b16 %v886, %v882
    %v1175 = vpack.c.b16 %v891, %v887
    %v1176 = vpack.c.b16 %v892, %v888
    %v1177 = vpack.c.b16 %v893, %v889
    %v1178 = vpack.c.b16 %v894, %v890
    %v1179 = vpack.c.b16 %v899, %v895
    %v1180 = vpack.c.b16 %v900, %v896
    %v1181 = vpack.c.b16 %v901, %v897
    %v1182 = vpack.c.b16 %v902, %v898
    %v1183 = vpack.c.b16 %v907, %v903
    %v1184 = vpack.c.b16 %v908, %v904
    %v1185 = vpack.c.b16 %v909, %v905
    %v1186 = vpack.c.b16 %v910, %v906
    %v1187 = vpack.c.b16 %v915, %v911
    %v1188 = vpack.c.b16 %v916, %v912
    %v1189 = vpack.c.b16 %v917, %v913
    %v1190 = vpack.c.b16 %v918, %v914
    %v1191 = vpack.c.b16 %v923, %v919
    %v1192 = vpack.c.b16 %v924, %v920
    %v1193 = vpack.c.b16 %v925, %v921
    %v1194 = vpack.c.b16 %v926, %v922
    %v1195 = vpack.c.b16 %v931, %v927
    %v1196 = vpack.c.b16 %v932, %v928
    %v1197 = vpack.c.b16 %v933, %v929
    %v1198 = vpack.c.b16 %v934, %v930
    %v1199 = vpack.c.b16 %v939, %v935
    %v1200 = vpack.c.b16 %v940, %v936
    %v1201 = vpack.c.b16 %v941, %v937
    %v1202 = vpack.c.b16 %v942, %v938
    %v1203 = vpack.c.b16 %v947, %v943
    %v1204 = vpack.c.b16 %v948, %v944
    %v1205 = vpack.c.b16 %v949, %v945
    %v1206 = vpack.c.b16 %v950, %v946
    %v1207 = vpack.c.b16 %v955, %v951
    %v1208 = vpack.c.b16 %v956, %v952
    %v1209 = vpack.c.b16 %v957, %v953
    %v1210 = vpack.c.b16 %v958, %v954
    %v1211 = vpack.c.b16 %v963, %v959
    %v1212 = vpack.c.b16 %v964, %v960
    %v1213 = vpack.c.b16 %v965, %v961
    %v1214 = vpack.c.b16 %v966, %v962
    %v1215 = vpack.c.b16 %v971, %v967
    %v1216 = vpack.c.b16 %v972, %v968
    %v1217 = vpack.c.b16 %v973, %v969
    %v1218 = vpack.c.b16 %v974, %v970
    %v1219 = vpack.c.b16 %v979, %v975
    %v1220 = vpack.c.b16 %v980, %v976
    %v1221 = vpack.c.b16 %v981, %v977
    %v1222 = vpack.c.b16 %v982, %v978
    %v1223 = vpack.c.b16 %v987, %v983
    %v1224 = vpack.c.b16 %v988, %v984
    %v1225 = vpack.c.b16 %v989, %v985
    %v1226 = vpack.c.b16 %v990, %v986
    %v1227 = vpack.c.b16 %v995, %v991
    %v1228 = vpack.c.b16 %v996, %v992
    %v1229 = vpack.c.b16 %v997, %v993
    %v1230 = vpack.c.b16 %v998, %v994
    %v1231 = vpack.c.b16 %v1003, %v999
    %v1232 = vpack.c.b16 %v1004, %v1000
    %v1233 = vpack.c.b16 %v1005, %v1001
    %v1234 = vpack.c.b16 %v1006, %v1002
    %v1235 = vpack.c.b16 %v1011, %v1007
    %v1236 = vpack.c.b16 %v1012, %v1008
    %v1237 = vpack.c.b16 %v1013, %v1009
    %v1238 = vpack.c.b16 %v1014, %v1010
    %1463 = vmatprep.subr.bf16.mxu0 %v1016
    %1464 = vmatpush1.bf16.msra.mxu0 %v1015
    %1465 = vmatprep.subr.bf16.mxu0 %v1020
    %1466 = vmatpush1.bf16.msra.mxu0 %v1019
    %1467 = vmatprep.subr.bf16.mxu0 %v1024
    %1468 = vmatpush1.bf16.msra.mxu0 %v1023
    %1469 = vmatprep.subr.bf16.mxu0 %v1028
    %1470 = vmatpush1.bf16.msra.mxu0 %v1027
    %1471 = vmatprep.subr.bf16.mxu0 %v1032
    %1472 = vmatpush1.bf16.msra.mxu0 %v1031
    %1473 = vmatprep.subr.bf16.mxu0 %v1036
    %1474 = vmatpush1.bf16.msra.mxu0 %v1035
    %1475 = vmatprep.subr.bf16.mxu0 %v1040
    %1476 = vmatpush1.bf16.msra.mxu0 %v1039
    %1477 = vmatprep.subr.bf16.mxu0 %v1044
    %1478 = vmatpush1.bf16.msra.mxu0 %v1043
    %1479 = vmatprep.subr.bf16.mxu0 %v1048
    %1480 = vmatpush1.bf16.msra.mxu0 %v1047
    %1481 = vmatprep.subr.bf16.mxu0 %v1052
    %1482 = vmatpush1.bf16.msra.mxu0 %v1051
    %1483 = vmatprep.subr.bf16.mxu0 %v1056
    %1484 = vmatpush1.bf16.msra.mxu0 %v1055
    %1485 = vmatprep.subr.bf16.mxu0 %v1060
    %1486 = vmatpush1.bf16.msra.mxu0 %v1059
    %1487 = vmatprep.subr.bf16.mxu0 %v1064
    %1488 = vmatpush1.bf16.msra.mxu0 %v1063
    %1489 = vmatprep.subr.bf16.mxu0 %v1068
    %1490 = vmatpush1.bf16.msra.mxu0 %v1067
    %1491 = vmatprep.subr.bf16.mxu0 %v1072
    %1492 = vmatpush1.bf16.msra.mxu0 %v1071
    %1493 = vmatprep.subr.bf16.mxu0 %v1076
    %1494 = vmatpush1.bf16.msra.mxu0 %v1075
    %1495 = vmatprep.mubr.bf16.mxu0 %v330
    %1496 = vmatmul.mubr.bf16.gmra.mrb[0].mxu0 %v329
    %v1497 = vpop.f32.mrb[0].mxu0
    %v1498 = vadd.f32 %v301, %v1497
    %v1499 = vpop.f32.mrb[0].mxu0
    %v1500 = vadd.f32 %v305, %v1499
    %v1501 = vpop.f32.mrb[0].mxu0
    %v1502 = vpop.f32.mrb[0].mxu0
    %1503 = vdwg.mxu0
    %1504 = vmatprep.subr.bf16.mxu0 %v1080
    %1505 = vmatpush1.bf16.msra.mxu0 %v1079
    %1506 = vmatprep.subr.bf16.mxu0 %v1084
    %1507 = vmatpush1.bf16.msra.mxu0 %v1083
    %1508 = vmatprep.subr.bf16.mxu0 %v1088
    %1509 = vmatpush1.bf16.msra.mxu0 %v1087
    %1510 = vmatprep.subr.bf16.mxu0 %v1092
    %1511 = vmatpush1.bf16.msra.mxu0 %v1091
    %1512 = vmatprep.subr.bf16.mxu0 %v1096
    %1513 = vmatpush1.bf16.msra.mxu0 %v1095
    %1514 = vmatprep.subr.bf16.mxu0 %v1100
    %1515 = vmatpush1.bf16.msra.mxu0 %v1099
    %1516 = vmatprep.subr.bf16.mxu0 %v1104
    %1517 = vmatpush1.bf16.msra.mxu0 %v1103
    %1518 = vmatprep.subr.bf16.mxu0 %v1108
    %1519 = vmatpush1.bf16.msra.mxu0 %v1107
    %1520 = vmatprep.subr.bf16.mxu0 %v1112
    %1521 = vmatpush1.bf16.msra.mxu0 %v1111
    %1522 = vmatprep.subr.bf16.mxu0 %v1116
    %1523 = vmatpush1.bf16.msra.mxu0 %v1115
    %1524 = vmatprep.subr.bf16.mxu0 %v1120
    %1525 = vmatpush1.bf16.msra.mxu0 %v1119
    %1526 = vmatprep.subr.bf16.mxu0 %v1124
    %1527 = vmatpush1.bf16.msra.mxu0 %v1123
    %1528 = vmatprep.subr.bf16.mxu0 %v1128
    %1529 = vmatpush1.bf16.msra.mxu0 %v1127
    %1530 = vmatprep.subr.bf16.mxu0 %v1132
    %1531 = vmatpush1.bf16.msra.mxu0 %v1131
    %1532 = vmatprep.subr.bf16.mxu0 %v1136
    %1533 = vmatpush1.bf16.msra.mxu0 %v1135
    %1534 = vmatprep.subr.bf16.mxu0 %v1140
    %1535 = vmatpush1.bf16.msra.mxu0 %v1139
    %1536 = vmatprep.mubr.bf16.mxu0 %v332
    %1537 = vmatmul.mubr.bf16.gmra.mrb[0].mxu0 %v331
    %v1538 = vpop.f32.mrb[0].mxu0
    %v1539 = vadd.f32 %v1498, %v1538
    %v1540 = vpop.f32.mrb[0].mxu0
    %v1541 = vadd.f32 %v1500, %v1540
    %v1542 = vpop.f32.mrb[0].mxu0
    %v1543 = vpop.f32.mrb[0].mxu0
    %1544 = vdwg.mxu0
    %1545 = vmatprep.subr.bf16.mxu0 %v1144
    %1546 = vmatpush1.bf16.msra.mxu0 %v1143
    %1547 = vmatprep.subr.bf16.mxu0 %v1148
    %1548 = vmatpush1.bf16.msra.mxu0 %v1147
    %1549 = vmatprep.subr.bf16.mxu0 %v1152
    %1550 = vmatpush1.bf16.msra.mxu0 %v1151
    %1551 = vmatprep.subr.bf16.mxu0 %v1156
    %1552 = vmatpush1.bf16.msra.mxu0 %v1155
    %1553 = vmatprep.subr.bf16.mxu0 %v1160
    %1554 = vmatpush1.bf16.msra.mxu0 %v1159
    %1555 = vmatprep.subr.bf16.mxu0 %v1164
    %1556 = vmatpush1.bf16.msra.mxu0 %v1163
    %1557 = vmatprep.subr.bf16.mxu0 %v1168
    %1558 = vmatpush1.bf16.msra.mxu0 %v1167
    %1559 = vmatprep.subr.bf16.mxu0 %v1172
    %1560 = vmatpush1.bf16.msra.mxu0 %v1171
    %1561 = vmatprep.subr.bf16.mxu0 %v1176
    %1562 = vmatpush1.bf16.msra.mxu0 %v1175
    %1563 = vmatprep.subr.bf16.mxu0 %v1180
    %1564 = vmatpush1.bf16.msra.mxu0 %v1179
    %1565 = vmatprep.subr.bf16.mxu0 %v1184
    %1566 = vmatpush1.bf16.msra.mxu0 %v1183
    %1567 = vmatprep.subr.bf16.mxu0 %v1188
    %1568 = vmatpush1.bf16.msra.mxu0 %v1187
    %1569 = vmatprep.subr.bf16.mxu0 %v1192
    %1570 = vmatpush1.bf16.msra.mxu0 %v1191
    %1571 = vmatprep.subr.bf16.mxu0 %v1196
    %1572 = vmatpush1.bf16.msra.mxu0 %v1195
    %1573 = vmatprep.subr.bf16.mxu0 %v1200
    %1574 = vmatpush1.bf16.msra.mxu0 %v1199
    %1575 = vmatprep.subr.bf16.mxu0 %v1204
    %1576 = vmatpush1.bf16.msra.mxu0 %v1203
    %1577 = vmatprep.mubr.bf16.mxu0 %v334
    %1578 = vmatmul.mubr.bf16.gmra.mrb[0].mxu0 %v333
    %v1579 = vpop.f32.mrb[0].mxu0
    %v1580 = vadd.f32 %v1539, %v1579
    %v1581 = vpop.f32.mrb[0].mxu0
    %v1582 = vadd.f32 %v1541, %v1581
    %v1583 = vpop.f32.mrb[0].mxu0
    %v1584 = vpop.f32.mrb[0].mxu0
    %1585 = vdwg.mxu0
    %1586 = vmatprep.subr.bf16.mxu0 %v1208
    %1587 = vmatpush1.bf16.msra.mxu0 %v1207
    %1588 = vmatprep.subr.bf16.mxu0 %v1212
    %1589 = vmatpush1.bf16.msra.mxu0 %v1211
    %1590 = vmatprep.subr.bf16.mxu0 %v1216
    %1591 = vmatpush1.bf16.msra.mxu0 %v1215
    %1592 = vmatprep.subr.bf16.mxu0 %v1220
    %1593 = vmatpush1.bf16.msra.mxu0 %v1219
    %1594 = vmatprep.subr.bf16.mxu0 %v1224
    %1595 = vmatpush1.bf16.msra.mxu0 %v1223
    %1596 = vmatprep.subr.bf16.mxu0 %v1228
    %1597 = vmatpush1.bf16.msra.mxu0 %v1227
    %1598 = vmatprep.subr.bf16.mxu0 %v1232
    %1599 = vmatpush1.bf16.msra.mxu0 %v1231
    %1600 = vmatprep.subr.bf16.mxu0 %v1236
    %1601 = vmatpush1.bf16.msra.mxu0 %v1235
    %1602 = vmatprep.subr.bf16.mxu0 0
    %1603 = vmatpush1.bf16.msra.mxu0 0
    %1604 = vmatprep.subr.bf16.mxu0 0
    %1605 = vmatpush1.bf16.msra.mxu0 0
    %1606 = vmatprep.subr.bf16.mxu0 0
    %1607 = vmatpush1.bf16.msra.mxu0 0
    %1608 = vmatprep.subr.bf16.mxu0 0
    %1609 = vmatpush1.bf16.msra.mxu0 0
    %1610 = vmatprep.subr.bf16.mxu0 0
    %1611 = vmatpush1.bf16.msra.mxu0 0
    %1612 = vmatprep.subr.bf16.mxu0 0
    %1613 = vmatpush1.bf16.msra.mxu0 0
    %1614 = vmatprep.subr.bf16.mxu0 0
    %1615 = vmatpush1.bf16.msra.mxu0 0
    %1616 = vmatprep.subr.bf16.mxu0 0
    %1617 = vmatpush1.bf16.msra.mxu0 0
    %1618 = vmatprep.mubr.bf16.mxu0 0
    %1619 = vmatmul.mubr.bf16.gmra.mrb[0].mxu0 %v335
    %v1620 = vpop.f32.mrb[0].mxu0
    %v1621 = vadd.f32 %v1580, %v1620
    %v1622 = vpop.f32.mrb[0].mxu0
    %v1623 = vadd.f32 %v1582, %v1622
    %v1624 = vpop.f32.mrb[0].mxu0
    %v1625 = vpop.f32.mrb[0].mxu0
    %1626 = vdwg.mxu0
    %1627 = vmatprep.subr.bf16.mxu0 %v1018
    %1628 = vmatpush1.bf16.msra.mxu0 %v1017
    %1629 = vmatprep.subr.bf16.mxu0 %v1022
    %1630 = vmatpush1.bf16.msra.mxu0 %v1021
    %1631 = vmatprep.subr.bf16.mxu0 %v1026
    %1632 = vmatpush1.bf16.msra.mxu0 %v1025
    %1633 = vmatprep.subr.bf16.mxu0 %v1030
    %1634 = vmatpush1.bf16.msra.mxu0 %v1029
    %1635 = vmatprep.subr.bf16.mxu0 %v1034
    %1636 = vmatpush1.bf16.msra.mxu0 %v1033
    %1637 = vmatprep.subr.bf16.mxu0 %v1038
    %1638 = vmatpush1.bf16.msra.mxu0 %v1037
    %1639 = vmatprep.subr.bf16.mxu0 %v1042
    %1640 = vmatpush1.bf16.msra.mxu0 %v1041
    %1641 = vmatprep.subr.bf16.mxu0 %v1046
    %1642 = vmatpush1.bf16.msra.mxu0 %v1045
    %1643 = vmatprep.subr.bf16.mxu0 %v1050
    %1644 = vmatpush1.bf16.msra.mxu0 %v1049
    %1645 = vmatprep.subr.bf16.mxu0 %v1054
    %1646 = vmatpush1.bf16.msra.mxu0 %v1053
    %1647 = vmatprep.subr.bf16.mxu0 %v1058
    %1648 = vmatpush1.bf16.msra.mxu0 %v1057
    %1649 = vmatprep.subr.bf16.mxu0 %v1062
    %1650 = vmatpush1.bf16.msra.mxu0 %v1061
    %1651 = vmatprep.subr.bf16.mxu0 %v1066
    %1652 = vmatpush1.bf16.msra.mxu0 %v1065
    %1653 = vmatprep.subr.bf16.mxu0 %v1070
    %1654 = vmatpush1.bf16.msra.mxu0 %v1069
    %1655 = vmatprep.subr.bf16.mxu0 %v1074
    %1656 = vmatpush1.bf16.msra.mxu0 %v1073
    %1657 = vmatprep.subr.bf16.mxu0 %v1078
    %1658 = vmatpush1.bf16.msra.mxu0 %v1077
    %1659 = vmatprep.mubr.bf16.mxu0 %v330
    %1660 = vmatmul.mubr.bf16.gmra.mrb[0].mxu0 %v329
    %v1661 = vpop.f32.mrb[0].mxu0
    %v1662 = vadd.f32 %v309, %v1661
    %v1663 = vpop.f32.mrb[0].mxu0
    %v1664 = vadd.f32 %v313, %v1663
    %v1665 = vpop.f32.mrb[0].mxu0
    %v1666 = vpop.f32.mrb[0].mxu0
    %1667 = vdwg.mxu0
    %1668 = vmatprep.subr.bf16.mxu0 %v1082
    %1669 = vmatpush1.bf16.msra.mxu0 %v1081
    %1670 = vmatprep.subr.bf16.mxu0 %v1086
    %1671 = vmatpush1.bf16.msra.mxu0 %v1085
    %1672 = vmatprep.subr.bf16.mxu0 %v1090
    %1673 = vmatpush1.bf16.msra.mxu0 %v1089
    %1674 = vmatprep.subr.bf16.mxu0 %v1094
    %1675 = vmatpush1.bf16.msra.mxu0 %v1093
    %1676 = vmatprep.subr.bf16.mxu0 %v1098
    %1677 = vmatpush1.bf16.msra.mxu0 %v1097
    %1678 = vmatprep.subr.bf16.mxu0 %v1102
    %1679 = vmatpush1.bf16.msra.mxu0 %v1101
    %1680 = vmatprep.subr.bf16.mxu0 %v1106
    %1681 = vmatpush1.bf16.msra.mxu0 %v1105
    %1682 = vmatprep.subr.bf16.mxu0 %v1110
    %1683 = vmatpush1.bf16.msra.mxu0 %v1109
    %1684 = vmatprep.subr.bf16.mxu0 %v1114
    %1685 = vmatpush1.bf16.msra.mxu0 %v1113
    %1686 = vmatprep.subr.bf16.mxu0 %v1118
    %1687 = vmatpush1.bf16.msra.mxu0 %v1117
    %1688 = vmatprep.subr.bf16.mxu0 %v1122
    %1689 = vmatpush1.bf16.msra.mxu0 %v1121
    %1690 = vmatprep.subr.bf16.mxu0 %v1126
    %1691 = vmatpush1.bf16.msra.mxu0 %v1125
    %1692 = vmatprep.subr.bf16.mxu0 %v1130
    %1693 = vmatpush1.bf16.msra.mxu0 %v1129
    %1694 = vmatprep.subr.bf16.mxu0 %v1134
    %1695 = vmatpush1.bf16.msra.mxu0 %v1133
    %1696 = vmatprep.subr.bf16.mxu0 %v1138
    %1697 = vmatpush1.bf16.msra.mxu0 %v1137
    %1698 = vmatprep.subr.bf16.mxu0 %v1142
    %1699 = vmatpush1.bf16.msra.mxu0 %v1141
    %1700 = vmatprep.mubr.bf16.mxu0 %v332
    %1701 = vmatmul.mubr.bf16.gmra.mrb[0].mxu0 %v331
    %v1702 = vpop.f32.mrb[0].mxu0
    %v1703 = vadd.f32 %v1662, %v1702
    %v1704 = vpop.f32.mrb[0].mxu0
    %v1705 = vadd.f32 %v1664, %v1704
    %v1706 = vpop.f32.mrb[0].mxu0
    %v1707 = vpop.f32.mrb[0].mxu0
    %1708 = vdwg.mxu0
    %1709 = vmatprep.subr.bf16.mxu0 %v1146
    %1710 = vmatpush1.bf16.msra.mxu0 %v1145
    %1711 = vmatprep.subr.bf16.mxu0 %v1150
    %1712 = vmatpush1.bf16.msra.mxu0 %v1149
    %1713 = vmatprep.subr.bf16.mxu0 %v1154
    %1714 = vmatpush1.bf16.msra.mxu0 %v1153
    %1715 = vmatprep.subr.bf16.mxu0 %v1158
    %1716 = vmatpush1.bf16.msra.mxu0 %v1157
    %1717 = vmatprep.subr.bf16.mxu0 %v1162
    %1718 = vmatpush1.bf16.msra.mxu0 %v1161
    %1719 = vmatprep.subr.bf16.mxu0 %v1166
    %1720 = vmatpush1.bf16.msra.mxu0 %v1165
    %1721 = vmatprep.subr.bf16.mxu0 %v1170
    %1722 = vmatpush1.bf16.msra.mxu0 %v1169
    %1723 = vmatprep.subr.bf16.mxu0 %v1174
    %1724 = vmatpush1.bf16.msra.mxu0 %v1173
    %1725 = vmatprep.subr.bf16.mxu0 %v1178
    %1726 = vmatpush1.bf16.msra.mxu0 %v1177
    %1727 = vmatprep.subr.bf16.mxu0 %v1182
    %1728 = vmatpush1.bf16.msra.mxu0 %v1181
    %1729 = vmatprep.subr.bf16.mxu0 %v1186
    %1730 = vmatpush1.bf16.msra.mxu0 %v1185
    %1731 = vmatprep.subr.bf16.mxu0 %v1190
    %1732 = vmatpush1.bf16.msra.mxu0 %v1189
    %1733 = vmatprep.subr.bf16.mxu0 %v1194
    %1734 = vmatpush1.bf16.msra.mxu0 %v1193
    %1735 = vmatprep.subr.bf16.mxu0 %v1198
    %1736 = vmatpush1.bf16.msra.mxu0 %v1197
    %1737 = vmatprep.subr.bf16.mxu0 %v1202
    %1738 = vmatpush1.bf16.msra.mxu0 %v1201
    %1739 = vmatprep.subr.bf16.mxu0 %v1206
    %1740 = vmatpush1.bf16.msra.mxu0 %v1205
    %1741 = vmatprep.mubr.bf16.mxu0 %v334
    %1742 = vmatmul.mubr.bf16.gmra.mrb[0].mxu0 %v333
    %v1743 = vpop.f32.mrb[0].mxu0
    %v1744 = vadd.f32 %v1703, %v1743
    %v1745 = vpop.f32.mrb[0].mxu0
    %v1746 = vadd.f32 %v1705, %v1745
    %v1747 = vpop.f32.mrb[0].mxu0
    %v1748 = vpop.f32.mrb[0].mxu0
    %1749 = vdwg.mxu0
    %1750 = vmatprep.subr.bf16.mxu0 %v1210
    %1751 = vmatpush1.bf16.msra.mxu0 %v1209
    %1752 = vmatprep.subr.bf16.mxu0 %v1214
    %1753 = vmatpush1.bf16.msra.mxu0 %v1213
    %1754 = vmatprep.subr.bf16.mxu0 %v1218
    %1755 = vmatpush1.bf16.msra.mxu0 %v1217
    %1756 = vmatprep.subr.bf16.mxu0 %v1222
    %1757 = vmatpush1.bf16.msra.mxu0 %v1221
    %1758 = vmatprep.subr.bf16.mxu0 %v1226
    %1759 = vmatpush1.bf16.msra.mxu0 %v1225
    %1760 = vmatprep.subr.bf16.mxu0 %v1230
    %1761 = vmatpush1.bf16.msra.mxu0 %v1229
    %1762 = vmatprep.subr.bf16.mxu0 %v1234
    %1763 = vmatpush1.bf16.msra.mxu0 %v1233
    %1764 = vmatprep.subr.bf16.mxu0 %v1238
    %1765 = vmatpush1.bf16.msra.mxu0 %v1237
    %1766 = vmatprep.subr.bf16.mxu0 0
    %1767 = vmatpush1.bf16.msra.mxu0 0
    %1768 = vmatprep.subr.bf16.mxu0 0
    %1769 = vmatpush1.bf16.msra.mxu0 0
    %1770 = vmatprep.subr.bf16.mxu0 0
    %1771 = vmatpush1.bf16.msra.mxu0 0
    %1772 = vmatprep.subr.bf16.mxu0 0
    %1773 = vmatpush1.bf16.msra.mxu0 0
    %1774 = vmatprep.subr.bf16.mxu0 0
    %1775 = vmatpush1.bf16.msra.mxu0 0
    %1776 = vmatprep.subr.bf16.mxu0 0
    %1777 = vmatpush1.bf16.msra.mxu0 0
    %1778 = vmatprep.subr.bf16.mxu0 0
    %1779 = vmatpush1.bf16.msra.mxu0 0
    %1780 = vmatprep.subr.bf16.mxu0 0
    %1781 = vmatpush1.bf16.msra.mxu0 0
    %1782 = vmatprep.mubr.bf16.mxu0 0
    %1783 = vmatmul.mubr.bf16.gmra.mrb[0].mxu0 %v335
    %v1784 = vpop.f32.mrb[0].mxu0
    %v1785 = vadd.f32 %v1744, %v1784
    %v1786 = vpop.f32.mrb[0].mxu0
    %v1787 = vadd.f32 %v1746, %v1786
    %v1788 = vpop.f32.mrb[0].mxu0
    %v1789 = vpop.f32.mrb[0].mxu0
    %1790 = vdwg.mxu0
    %v1791 = vmax.f32 %v1621, 0.0
    %v1792 = vmax.f32 %v1623, 0.0
    %v1793 = vmax.f32 %v1785, 0.0
    %v1794 = vmax.f32 %v1787, 0.0
    %v1795 = vpack.c.bf16 %v1791, %v1791
    %v1796 = vpack.c.bf16 %v1792, %v1792
    %v1797 = vpack.c.bf16 %v1793, %v1793
    %v1798 = vpack.c.bf16 %v1794, %v1794
    %v1799 = vld [vmem:[#allocation4] sm:$0xff]
    %v1800 = vld [vmem:[#allocation4 + $0x8] sm:$0xff]
    %v1801 = vld [vmem:[#allocation4 + $0x10] sm:$0xff]
    %v1802 = vld [vmem:[#allocation4 + $0x18] sm:$0xff]
    %v1803 = vld [vmem:[#allocation4 + $0x20] sm:$0xff]
    %v1804 = vld [vmem:[#allocation4 + $0x28] sm:$0xff]
    %v1805 = vld [vmem:[#allocation4 + $0x30] sm:$0xff]
    %v1806 = vld [vmem:[#allocation4 + $0x38] sm:$0xff]
    %v1807 = vld [vmem:[#allocation4 + $0x40] sm:$0xff]
    %v1808 = vld [vmem:[#allocation4 + $0x48] sm:$0xff]
    %v1809 = vld [vmem:[#allocation4 + $0x50] sm:$0xff]
    %v1810 = vld [vmem:[#allocation4 + $0x58] sm:$0xff]
    %v1811 = vld [vmem:[#allocation4 + $0x60] sm:$0xff]
    %v1812 = vld [vmem:[#allocation4 + $0x68] sm:$0xff]
    %v1813 = vld [vmem:[#allocation4 + $0x70] sm:$0xff]
    %v1814 = vld [vmem:[#allocation4 + $0x78] sm:$0xff]
    %v1815 = vld [vmem:[#allocation4 + $0x80] sm:$0xff]
    %v1816 = vld [vmem:[#allocation4 + $0x88] sm:$0xff]
    %v1817 = vld [vmem:[#allocation4 + $0x90] sm:$0xff]
    %v1818 = vld [vmem:[#allocation4 + $0x98] sm:$0xff]
    %v1819 = vld [vmem:[#allocation4 + $0xa0] sm:$0xff]
    %v1820 = vld [vmem:[#allocation4 + $0xa8] sm:$0xff]
    %v1821 = vld [vmem:[#allocation4 + $0xb0] sm:$0xff]
    %v1822 = vld [vmem:[#allocation4 + $0xb8] sm:$0xff]
    %v1823 = vld [vmem:[#allocation4 + $0xc0] sm:$0xff]
    %v1824 = vld [vmem:[#allocation4 + $0xc8] sm:$0xff]
    %v1825 = vld [vmem:[#allocation4 + $0xd0] sm:$0xff]
    %v1826 = vld [vmem:[#allocation4 + $0xd8] sm:$0xff]
    %v1827 = vld [vmem:[#allocation4 + $0xe0] sm:$0xff]
    %v1828 = vld [vmem:[#allocation4 + $0xe8] sm:$0xff]
    %v1829 = vld [vmem:[#allocation4 + $0xf0] sm:$0xff]
    %v1830 = vld [vmem:[#allocation4 + $0xf8] sm:$0xff]
    %v1831 = vld [vmem:[#allocation4 + $0x100] sm:$0xff]
    %v1832 = vld [vmem:[#allocation4 + $0x108] sm:$0xff]
    %v1833 = vld [vmem:[#allocation4 + $0x110] sm:$0xff]
    %v1834 = vld [vmem:[#allocation4 + $0x118] sm:$0xff]
    %v1835 = vld [vmem:[#allocation4 + $0x120] sm:$0xff]
    %v1836 = vld [vmem:[#allocation4 + $0x128] sm:$0xff]
    %v1837 = vld [vmem:[#allocation4 + $0x130] sm:$0xff]
    %v1838 = vld [vmem:[#allocation4 + $0x138] sm:$0xff]
    %v1839 = vld [vmem:[#allocation4 + $0x140] sm:$0xff]
    %v1840 = vld [vmem:[#allocation4 + $0x148] sm:$0xff]
    %v1841 = vld [vmem:[#allocation4 + $0x150] sm:$0xff]
    %v1842 = vld [vmem:[#allocation4 + $0x158] sm:$0xff]
    %v1843 = vld [vmem:[#allocation4 + $0x160] sm:$0xff]
    %v1844 = vld [vmem:[#allocation4 + $0x168] sm:$0xff]
    %v1845 = vld [vmem:[#allocation4 + $0x170] sm:$0xff]
    %v1846 = vld [vmem:[#allocation4 + $0x178] sm:$0xff]
    %v1847 = vld [vmem:[#allocation4 + $0x180] sm:$0xff]
    %v1848 = vld [vmem:[#allocation4 + $0x188] sm:$0xff]
    %v1849 = vld [vmem:[#allocation4 + $0x190] sm:$0xff]
    %v1850 = vld [vmem:[#allocation4 + $0x198] sm:$0xff]
    %v1851 = vld [vmem:[#allocation4 + $0x1a0] sm:$0xff]
    %v1852 = vld [vmem:[#allocation4 + $0x1a8] sm:$0xff]
    %v1853 = vld [vmem:[#allocation4 + $0x1b0] sm:$0xff]
    %v1854 = vld [vmem:[#allocation4 + $0x1b8] sm:$0xff]
    %v1855 = vld [vmem:[#allocation4 + $0x1c0] sm:$0xff]
    %v1856 = vld [vmem:[#allocation4 + $0x1c8] sm:$0xff]
    %v1857 = vld [vmem:[#allocation4 + $0x1d0] sm:$0xff]
    %v1858 = vld [vmem:[#allocation4 + $0x1d8] sm:$0xff]
    %v1859 = vld [vmem:[#allocation4 + $0x1e0] sm:$0xff]
    %v1860 = vld [vmem:[#allocation4 + $0x1e8] sm:$0xff]
    %v1861 = vld [vmem:[#allocation4 + $0x1f0] sm:$0xff]
    %v1862 = vld [vmem:[#allocation4 + $0x1f8] sm:$0xff]
    %v1863 = vld [vmem:[#allocation4 + $0x200] sm:$0xff]
    %v1864 = vld [vmem:[#allocation4 + $0x208] sm:$0xff]
    %v1865 = vld [vmem:[#allocation4 + $0x210] sm:$0xff]
    %v1866 = vld [vmem:[#allocation4 + $0x218] sm:$0xff]
    %v1867 = vld [vmem:[#allocation4 + $0x220] sm:$0xff]
    %v1868 = vld [vmem:[#allocation4 + $0x228] sm:$0xff]
    %v1869 = vld [vmem:[#allocation4 + $0x230] sm:$0xff]
    %v1870 = vld [vmem:[#allocation4 + $0x238] sm:$0xff]
    %v1871 = vld [vmem:[#allocation4 + $0x240] sm:$0xff]
    %v1872 = vld [vmem:[#allocation4 + $0x248] sm:$0xff]
    %v1873 = vld [vmem:[#allocation4 + $0x250] sm:$0xff]
    %v1874 = vld [vmem:[#allocation4 + $0x258] sm:$0xff]
    %v1875 = vld [vmem:[#allocation4 + $0x260] sm:$0xff]
    %v1876 = vld [vmem:[#allocation4 + $0x268] sm:$0xff]
    %v1877 = vld [vmem:[#allocation4 + $0x270] sm:$0xff]
    %v1878 = vld [vmem:[#allocation4 + $0x278] sm:$0xff]
    %v1879 = vld [vmem:[#allocation4 + $0x280] sm:$0xff]
    %v1880 = vld [vmem:[#allocation4 + $0x288] sm:$0xff]
    %v1881 = vld [vmem:[#allocation4 + $0x290] sm:$0xff]
    %v1882 = vld [vmem:[#allocation4 + $0x298] sm:$0xff]
    %v1883 = vld [vmem:[#allocation4 + $0x2a0] sm:$0xff]
    %v1884 = vld [vmem:[#allocation4 + $0x2a8] sm:$0xff]
    %v1885 = vld [vmem:[#allocation4 + $0x2b0] sm:$0xff]
    %v1886 = vld [vmem:[#allocation4 + $0x2b8] sm:$0xff]
    %v1887 = vld [vmem:[#allocation4 + $0x2c0] sm:$0xff]
    %v1888 = vld [vmem:[#allocation4 + $0x2c8] sm:$0xff]
    %v1889 = vld [vmem:[#allocation4 + $0x2d0] sm:$0xff]
    %v1890 = vld [vmem:[#allocation4 + $0x2d8] sm:$0xff]
    %v1891 = vld [vmem:[#allocation4 + $0x2e0] sm:$0xff]
    %v1892 = vld [vmem:[#allocation4 + $0x2e8] sm:$0xff]
    %v1893 = vld [vmem:[#allocation4 + $0x2f0] sm:$0xff]
    %v1894 = vld [vmem:[#allocation4 + $0x2f8] sm:$0xff]
    %v1895 = vld [vmem:[#allocation4 + $0x300] sm:$0xff]
    %v1896 = vld [vmem:[#allocation4 + $0x308] sm:$0xff]
    %v1897 = vld [vmem:[#allocation4 + $0x310] sm:$0xff]
    %v1898 = vld [vmem:[#allocation4 + $0x318] sm:$0xff]
    %v1899 = vld [vmem:[#allocation4 + $0x320] sm:$0xff]
    %v1900 = vld [vmem:[#allocation4 + $0x328] sm:$0xff]
    %v1901 = vld [vmem:[#allocation4 + $0x330] sm:$0xff]
    %v1902 = vld [vmem:[#allocation4 + $0x338] sm:$0xff]
    %v1903 = vld [vmem:[#allocation4 + $0x340] sm:$0xff]
    %v1904 = vld [vmem:[#allocation4 + $0x348] sm:$0xff]
    %v1905 = vld [vmem:[#allocation4 + $0x350] sm:$0xff]
    %v1906 = vld [vmem:[#allocation4 + $0x358] sm:$0xff]
    %v1907 = vld [vmem:[#allocation4 + $0x360] sm:$0xff]
    %v1908 = vld [vmem:[#allocation4 + $0x368] sm:$0xff]
    %v1909 = vld [vmem:[#allocation4 + $0x370] sm:$0xff]
    %v1910 = vld [vmem:[#allocation4 + $0x378] sm:$0xff]
    %v1911 = vld [vmem:[#allocation4 + $0x380] sm:$0xff]
    %v1912 = vld [vmem:[#allocation4 + $0x388] sm:$0xff]
    %v1913 = vld [vmem:[#allocation4 + $0x390] sm:$0xff]
    %v1914 = vld [vmem:[#allocation4 + $0x398] sm:$0xff]
    %v1915 = vld [vmem:[#allocation4 + $0x3a0] sm:$0xff]
    %v1916 = vld [vmem:[#allocation4 + $0x3a8] sm:$0xff]
    %v1917 = vld [vmem:[#allocation4 + $0x3b0] sm:$0xff]
    %v1918 = vld [vmem:[#allocation4 + $0x3b8] sm:$0xff]
    %v1919 = vld [vmem:[#allocation4 + $0x3c0] sm:$0xff]
    %v1920 = vld [vmem:[#allocation4 + $0x3c8] sm:$0xff]
    %v1921 = vld [vmem:[#allocation4 + $0x3d0] sm:$0xff]
    %v1922 = vld [vmem:[#allocation4 + $0x3d8] sm:$0xff]
    %v1923 = vld [vmem:[#allocation4 + $0x3e0] sm:$0xff]
    %v1924 = vld [vmem:[#allocation4 + $0x3e8] sm:$0xff]
    %v1925 = vld [vmem:[#allocation4 + $0x3f0] sm:$0xff]
    %v1926 = vld [vmem:[#allocation4 + $0x3f8] sm:$0xff]
    %v1927 = vld [vmem:[%s4] sm:$0xf]
    %v1929 = vlaneseq
    %v1930 = vshrl.u32 %v1929, 7
    %v1931 = vsub.s32 0, %v1930
    %v1932 = vrot.slane %v1927, %v1931
    %v1933 = vlaneseq
    %v1934 = vshrl.u32 %v1933, 7
    %v1935 = vsub.s32 1, %v1934
    %v1936 = vrot.slane %v1927, %v1935
    %v1937 = vlaneseq
    %v1938 = vshrl.u32 %v1937, 7
    %v1939 = vsub.s32 2, %v1938
    %v1940 = vrot.slane %v1927, %v1939
    %v1941 = vlaneseq
    %v1942 = vshrl.u32 %v1941, 7
    %v1943 = vsub.s32 3, %v1942
    %v1944 = vrot.slane %v1927, %v1943
    %v2077 = vunpack.c.l.b16 %v1799
    %v2078 = vunpack.c.h.b16 %v1799
    %v2079 = vunpack.c.l.b16 %v1800
    %v2080 = vunpack.c.h.b16 %v1800
    %v2081 = vunpack.c.l.b16 %v1801
    %v2082 = vunpack.c.h.b16 %v1801
    %v2083 = vunpack.c.l.b16 %v1802
    %v2084 = vunpack.c.h.b16 %v1802
    %v2085 = vunpack.c.l.b16 %v1803
    %v2086 = vunpack.c.h.b16 %v1803
    %v2087 = vunpack.c.l.b16 %v1804
    %v2088 = vunpack.c.h.b16 %v1804
    %v2089 = vunpack.c.l.b16 %v1805
    %v2090 = vunpack.c.h.b16 %v1805
    %v2091 = vunpack.c.l.b16 %v1806
    %v2092 = vunpack.c.h.b16 %v1806
    %v2093 = vunpack.c.l.b16 %v1807
    %v2094 = vunpack.c.h.b16 %v1807
    %v2095 = vunpack.c.l.b16 %v1808
    %v2096 = vunpack.c.h.b16 %v1808
    %v2097 = vunpack.c.l.b16 %v1809
    %v2098 = vunpack.c.h.b16 %v1809
    %v2099 = vunpack.c.l.b16 %v1810
    %v2100 = vunpack.c.h.b16 %v1810
    %v2101 = vunpack.c.l.b16 %v1811
    %v2102 = vunpack.c.h.b16 %v1811
    %v2103 = vunpack.c.l.b16 %v1812
    %v2104 = vunpack.c.h.b16 %v1812
    %v2105 = vunpack.c.l.b16 %v1813
    %v2106 = vunpack.c.h.b16 %v1813
    %v2107 = vunpack.c.l.b16 %v1814
    %v2108 = vunpack.c.h.b16 %v1814
    %v2109 = vunpack.c.l.b16 %v1815
    %v2110 = vunpack.c.h.b16 %v1815
    %v2111 = vunpack.c.l.b16 %v1816
    %v2112 = vunpack.c.h.b16 %v1816
    %v2113 = vunpack.c.l.b16 %v1817
    %v2114 = vunpack.c.h.b16 %v1817
    %v2115 = vunpack.c.l.b16 %v1818
    %v2116 = vunpack.c.h.b16 %v1818
    %v2117 = vunpack.c.l.b16 %v1819
    %v2118 = vunpack.c.h.b16 %v1819
    %v2119 = vunpack.c.l.b16 %v1820
    %v2120 = vunpack.c.h.b16 %v1820
    %v2121 = vunpack.c.l.b16 %v1821
    %v2122 = vunpack.c.h.b16 %v1821
    %v2123 = vunpack.c.l.b16 %v1822
    %v2124 = vunpack.c.h.b16 %v1822
    %v2125 = vunpack.c.l.b16 %v1823
    %v2126 = vunpack.c.h.b16 %v1823
    %v2127 = vunpack.c.l.b16 %v1824
    %v2128 = vunpack.c.h.b16 %v1824
    %v2129 = vunpack.c.l.b16 %v1825
    %v2130 = vunpack.c.h.b16 %v1825
    %v2131 = vunpack.c.l.b16 %v1826
    %v2132 = vunpack.c.h.b16 %v1826
    %v2133 = vunpack.c.l.b16 %v1827
    %v2134 = vunpack.c.h.b16 %v1827
    %v2135 = vunpack.c.l.b16 %v1828
    %v2136 = vunpack.c.h.b16 %v1828
    %v2137 = vunpack.c.l.b16 %v1829
    %v2138 = vunpack.c.h.b16 %v1829
    %v2139 = vunpack.c.l.b16 %v1830
    %v2140 = vunpack.c.h.b16 %v1830
    %v2141 = vunpack.c.l.b16 %v1831
    %v2142 = vunpack.c.h.b16 %v1831
    %v2143 = vunpack.c.l.b16 %v1832
    %v2144 = vunpack.c.h.b16 %v1832
    %v2145 = vunpack.c.l.b16 %v1833
    %v2146 = vunpack.c.h.b16 %v1833
    %v2147 = vunpack.c.l.b16 %v1834
    %v2148 = vunpack.c.h.b16 %v1834
    %v2149 = vunpack.c.l.b16 %v1835
    %v2150 = vunpack.c.h.b16 %v1835
    %v2151 = vunpack.c.l.b16 %v1836
    %v2152 = vunpack.c.h.b16 %v1836
    %v2153 = vunpack.c.l.b16 %v1837
    %v2154 = vunpack.c.h.b16 %v1837
    %v2155 = vunpack.c.l.b16 %v1838
    %v2156 = vunpack.c.h.b16 %v1838
    %v2157 = vunpack.c.l.b16 %v1839
    %v2158 = vunpack.c.h.b16 %v1839
    %v2159 = vunpack.c.l.b16 %v1840
    %v2160 = vunpack.c.h.b16 %v1840
    %v2161 = vunpack.c.l.b16 %v1841
    %v2162 = vunpack.c.h.b16 %v1841
    %v2163 = vunpack.c.l.b16 %v1842
    %v2164 = vunpack.c.h.b16 %v1842
    %v2165 = vunpack.c.l.b16 %v1843
    %v2166 = vunpack.c.h.b16 %v1843
    %v2167 = vunpack.c.l.b16 %v1844
    %v2168 = vunpack.c.h.b16 %v1844
    %v2169 = vunpack.c.l.b16 %v1845
    %v2170 = vunpack.c.h.b16 %v1845
    %v2171 = vunpack.c.l.b16 %v1846
    %v2172 = vunpack.c.h.b16 %v1846
    %v2173 = vunpack.c.l.b16 %v1847
    %v2174 = vunpack.c.h.b16 %v1847
    %v2175 = vunpack.c.l.b16 %v1848
    %v2176 = vunpack.c.h.b16 %v1848
    %v2177 = vunpack.c.l.b16 %v1849
    %v2178 = vunpack.c.h.b16 %v1849
    %v2179 = vunpack.c.l.b16 %v1850
    %v2180 = vunpack.c.h.b16 %v1850
    %v2181 = vunpack.c.l.b16 %v1851
    %v2182 = vunpack.c.h.b16 %v1851
    %v2183 = vunpack.c.l.b16 %v1852
    %v2184 = vunpack.c.h.b16 %v1852
    %v2185 = vunpack.c.l.b16 %v1853
    %v2186 = vunpack.c.h.b16 %v1853
    %v2187 = vunpack.c.l.b16 %v1854
    %v2188 = vunpack.c.h.b16 %v1854
    %v2189 = vunpack.c.l.b16 %v1855
    %v2190 = vunpack.c.h.b16 %v1855
    %v2191 = vunpack.c.l.b16 %v1856
    %v2192 = vunpack.c.h.b16 %v1856
    %v2193 = vunpack.c.l.b16 %v1857
    %v2194 = vunpack.c.h.b16 %v1857
    %v2195 = vunpack.c.l.b16 %v1858
    %v2196 = vunpack.c.h.b16 %v1858
    %v2197 = vunpack.c.l.b16 %v1859
    %v2198 = vunpack.c.h.b16 %v1859
    %v2199 = vunpack.c.l.b16 %v1860
    %v2200 = vunpack.c.h.b16 %v1860
    %v2201 = vunpack.c.l.b16 %v1861
    %v2202 = vunpack.c.h.b16 %v1861
    %v2203 = vunpack.c.l.b16 %v1862
    %v2204 = vunpack.c.h.b16 %v1862
    %v2205 = vunpack.c.l.b16 %v1863
    %v2206 = vunpack.c.h.b16 %v1863
    %v2207 = vunpack.c.l.b16 %v1864
    %v2208 = vunpack.c.h.b16 %v1864
    %v2209 = vunpack.c.l.b16 %v1865
    %v2210 = vunpack.c.h.b16 %v1865
    %v2211 = vunpack.c.l.b16 %v1866
    %v2212 = vunpack.c.h.b16 %v1866
    %v2213 = vunpack.c.l.b16 %v1867
    %v2214 = vunpack.c.h.b16 %v1867
    %v2215 = vunpack.c.l.b16 %v1868
    %v2216 = vunpack.c.h.b16 %v1868
    %v2217 = vunpack.c.l.b16 %v1869
    %v2218 = vunpack.c.h.b16 %v1869
    %v2219 = vunpack.c.l.b16 %v1870
    %v2220 = vunpack.c.h.b16 %v1870
    %v2221 = vunpack.c.l.b16 %v1871
    %v2222 = vunpack.c.h.b16 %v1871
    %v2223 = vunpack.c.l.b16 %v1872
    %v2224 = vunpack.c.h.b16 %v1872
    %v2225 = vunpack.c.l.b16 %v1873
    %v2226 = vunpack.c.h.b16 %v1873
    %v2227 = vunpack.c.l.b16 %v1874
    %v2228 = vunpack.c.h.b16 %v1874
    %v2229 = vunpack.c.l.b16 %v1875
    %v2230 = vunpack.c.h.b16 %v1875
    %v2231 = vunpack.c.l.b16 %v1876
    %v2232 = vunpack.c.h.b16 %v1876
    %v2233 = vunpack.c.l.b16 %v1877
    %v2234 = vunpack.c.h.b16 %v1877
    %v2235 = vunpack.c.l.b16 %v1878
    %v2236 = vunpack.c.h.b16 %v1878
    %v2237 = vunpack.c.l.b16 %v1879
    %v2238 = vunpack.c.h.b16 %v1879
    %v2239 = vunpack.c.l.b16 %v1880
    %v2240 = vunpack.c.h.b16 %v1880
    %v2241 = vunpack.c.l.b16 %v1881
    %v2242 = vunpack.c.h.b16 %v1881
    %v2243 = vunpack.c.l.b16 %v1882
    %v2244 = vunpack.c.h.b16 %v1882
    %v2245 = vunpack.c.l.b16 %v1883
    %v2246 = vunpack.c.h.b16 %v1883
    %v2247 = vunpack.c.l.b16 %v1884
    %v2248 = vunpack.c.h.b16 %v1884
    %v2249 = vunpack.c.l.b16 %v1885
    %v2250 = vunpack.c.h.b16 %v1885
    %v2251 = vunpack.c.l.b16 %v1886
    %v2252 = vunpack.c.h.b16 %v1886
    %v2253 = vunpack.c.l.b16 %v1887
    %v2254 = vunpack.c.h.b16 %v1887
    %v2255 = vunpack.c.l.b16 %v1888
    %v2256 = vunpack.c.h.b16 %v1888
    %v2257 = vunpack.c.l.b16 %v1889
    %v2258 = vunpack.c.h.b16 %v1889
    %v2259 = vunpack.c.l.b16 %v1890
    %v2260 = vunpack.c.h.b16 %v1890
    %v2261 = vunpack.c.l.b16 %v1891
    %v2262 = vunpack.c.h.b16 %v1891
    %v2263 = vunpack.c.l.b16 %v1892
    %v2264 = vunpack.c.h.b16 %v1892
    %v2265 = vunpack.c.l.b16 %v1893
    %v2266 = vunpack.c.h.b16 %v1893
    %v2267 = vunpack.c.l.b16 %v1894
    %v2268 = vunpack.c.h.b16 %v1894
    %v2269 = vunpack.c.l.b16 %v1895
    %v2270 = vunpack.c.h.b16 %v1895
    %v2271 = vunpack.c.l.b16 %v1896
    %v2272 = vunpack.c.h.b16 %v1896
    %v2273 = vunpack.c.l.b16 %v1897
    %v2274 = vunpack.c.h.b16 %v1897
    %v2275 = vunpack.c.l.b16 %v1898
    %v2276 = vunpack.c.h.b16 %v1898
    %v2277 = vunpack.c.l.b16 %v1899
    %v2278 = vunpack.c.h.b16 %v1899
    %v2279 = vunpack.c.l.b16 %v1900
    %v2280 = vunpack.c.h.b16 %v1900
    %v2281 = vunpack.c.l.b16 %v1901
    %v2282 = vunpack.c.h.b16 %v1901
    %v2283 = vunpack.c.l.b16 %v1902
    %v2284 = vunpack.c.h.b16 %v1902
    %v2285 = vunpack.c.l.b16 %v1903
    %v2286 = vunpack.c.h.b16 %v1903
    %v2287 = vunpack.c.l.b16 %v1904
    %v2288 = vunpack.c.h.b16 %v1904
    %v2289 = vunpack.c.l.b16 %v1905
    %v2290 = vunpack.c.h.b16 %v1905
    %v2291 = vunpack.c.l.b16 %v1906
    %v2292 = vunpack.c.h.b16 %v1906
    %v2293 = vunpack.c.l.b16 %v1907
    %v2294 = vunpack.c.h.b16 %v1907
    %v2295 = vunpack.c.l.b16 %v1908
    %v2296 = vunpack.c.h.b16 %v1908
    %v2297 = vunpack.c.l.b16 %v1909
    %v2298 = vunpack.c.h.b16 %v1909
    %v2299 = vunpack.c.l.b16 %v1910
    %v2300 = vunpack.c.h.b16 %v1910
    %v2301 = vunpack.c.l.b16 %v1911
    %v2302 = vunpack.c.h.b16 %v1911
    %v2303 = vunpack.c.l.b16 %v1912
    %v2304 = vunpack.c.h.b16 %v1912
    %v2305 = vunpack.c.l.b16 %v1913
    %v2306 = vunpack.c.h.b16 %v1913
    %v2307 = vunpack.c.l.b16 %v1914
    %v2308 = vunpack.c.h.b16 %v1914
    %v2309 = vunpack.c.l.b16 %v1915
    %v2310 = vunpack.c.h.b16 %v1915
    %v2311 = vunpack.c.l.b16 %v1916
    %v2312 = vunpack.c.h.b16 %v1916
    %v2313 = vunpack.c.l.b16 %v1917
    %v2314 = vunpack.c.h.b16 %v1917
    %v2315 = vunpack.c.l.b16 %v1918
    %v2316 = vunpack.c.h.b16 %v1918
    %v2317 = vunpack.c.l.b16 %v1919
    %v2318 = vunpack.c.h.b16 %v1919
    %v2319 = vunpack.c.l.b16 %v1920
    %v2320 = vunpack.c.h.b16 %v1920
    %v2321 = vunpack.c.l.b16 %v1921
    %v2322 = vunpack.c.h.b16 %v1921
    %v2323 = vunpack.c.l.b16 %v1922
    %v2324 = vunpack.c.h.b16 %v1922
    %v2325 = vunpack.c.l.b16 %v1923
    %v2326 = vunpack.c.h.b16 %v1923
    %v2327 = vunpack.c.l.b16 %v1924
    %v2328 = vunpack.c.h.b16 %v1924
    %v2329 = vunpack.c.l.b16 %v1925
    %v2330 = vunpack.c.h.b16 %v1925
    %v2331 = vunpack.c.l.b16 %v1926
    %v2332 = vunpack.c.h.b16 %v1926
    %v2333 = vpack.c.b16 %v2081, %v2077
    %v2334 = vpack.c.b16 %v2082, %v2078
    %v2335 = vpack.c.b16 %v2083, %v2079
    %v2336 = vpack.c.b16 %v2084, %v2080
    %v2337 = vpack.c.b16 %v2089, %v2085
    %v2338 = vpack.c.b16 %v2090, %v2086
    %v2339 = vpack.c.b16 %v2091, %v2087
    %v2340 = vpack.c.b16 %v2092, %v2088
    %v2341 = vpack.c.b16 %v2097, %v2093
    %v2342 = vpack.c.b16 %v2098, %v2094
    %v2343 = vpack.c.b16 %v2099, %v2095
    %v2344 = vpack.c.b16 %v2100, %v2096
    %v2345 = vpack.c.b16 %v2105, %v2101
    %v2346 = vpack.c.b16 %v2106, %v2102
    %v2347 = vpack.c.b16 %v2107, %v2103
    %v2348 = vpack.c.b16 %v2108, %v2104
    %v2349 = vpack.c.b16 %v2113, %v2109
    %v2350 = vpack.c.b16 %v2114, %v2110
    %v2351 = vpack.c.b16 %v2115, %v2111
    %v2352 = vpack.c.b16 %v2116, %v2112
    %v2353 = vpack.c.b16 %v2121, %v2117
    %v2354 = vpack.c.b16 %v2122, %v2118
    %v2355 = vpack.c.b16 %v2123, %v2119
    %v2356 = vpack.c.b16 %v2124, %v2120
    %v2357 = vpack.c.b16 %v2129, %v2125
    %v2358 = vpack.c.b16 %v2130, %v2126
    %v2359 = vpack.c.b16 %v2131, %v2127
    %v2360 = vpack.c.b16 %v2132, %v2128
    %v2361 = vpack.c.b16 %v2137, %v2133
    %v2362 = vpack.c.b16 %v2138, %v2134
    %v2363 = vpack.c.b16 %v2139, %v2135
    %v2364 = vpack.c.b16 %v2140, %v2136
    %v2365 = vpack.c.b16 %v2145, %v2141
    %v2366 = vpack.c.b16 %v2146, %v2142
    %v2367 = vpack.c.b16 %v2147, %v2143
    %v2368 = vpack.c.b16 %v2148, %v2144
    %v2369 = vpack.c.b16 %v2153, %v2149
    %v2370 = vpack.c.b16 %v2154, %v2150
    %v2371 = vpack.c.b16 %v2155, %v2151
    %v2372 = vpack.c.b16 %v2156, %v2152
    %v2373 = vpack.c.b16 %v2161, %v2157
    %v2374 = vpack.c.b16 %v2162, %v2158
    %v2375 = vpack.c.b16 %v2163, %v2159
    %v2376 = vpack.c.b16 %v2164, %v2160
    %v2377 = vpack.c.b16 %v2169, %v2165
    %v2378 = vpack.c.b16 %v2170, %v2166
    %v2379 = vpack.c.b16 %v2171, %v2167
    %v2380 = vpack.c.b16 %v2172, %v2168
    %v2381 = vpack.c.b16 %v2177, %v2173
    %v2382 = vpack.c.b16 %v2178, %v2174
    %v2383 = vpack.c.b16 %v2179, %v2175
    %v2384 = vpack.c.b16 %v2180, %v2176
    %v2385 = vpack.c.b16 %v2185, %v2181
    %v2386 = vpack.c.b16 %v2186, %v2182
    %v2387 = vpack.c.b16 %v2187, %v2183
    %v2388 = vpack.c.b16 %v2188, %v2184
    %v2389 = vpack.c.b16 %v2193, %v2189
    %v2390 = vpack.c.b16 %v2194, %v2190
    %v2391 = vpack.c.b16 %v2195, %v2191
    %v2392 = vpack.c.b16 %v2196, %v2192
    %v2393 = vpack.c.b16 %v2201, %v2197
    %v2394 = vpack.c.b16 %v2202, %v2198
    %v2395 = vpack.c.b16 %v2203, %v2199
    %v2396 = vpack.c.b16 %v2204, %v2200
    %v2397 = vpack.c.b16 %v2209, %v2205
    %v2398 = vpack.c.b16 %v2210, %v2206
    %v2399 = vpack.c.b16 %v2211, %v2207
    %v2400 = vpack.c.b16 %v2212, %v2208
    %v2401 = vpack.c.b16 %v2217, %v2213
    %v2402 = vpack.c.b16 %v2218, %v2214
    %v2403 = vpack.c.b16 %v2219, %v2215
    %v2404 = vpack.c.b16 %v2220, %v2216
    %v2405 = vpack.c.b16 %v2225, %v2221
    %v2406 = vpack.c.b16 %v2226, %v2222
    %v2407 = vpack.c.b16 %v2227, %v2223
    %v2408 = vpack.c.b16 %v2228, %v2224
    %v2409 = vpack.c.b16 %v2233, %v2229
    %v2410 = vpack.c.b16 %v2234, %v2230
    %v2411 = vpack.c.b16 %v2235, %v2231
    %v2412 = vpack.c.b16 %v2236, %v2232
    %v2413 = vpack.c.b16 %v2241, %v2237
    %v2414 = vpack.c.b16 %v2242, %v2238
    %v2415 = vpack.c.b16 %v2243, %v2239
    %v2416 = vpack.c.b16 %v2244, %v2240
    %v2417 = vpack.c.b16 %v2249, %v2245
    %v2418 = vpack.c.b16 %v2250, %v2246
    %v2419 = vpack.c.b16 %v2251, %v2247
    %v2420 = vpack.c.b16 %v2252, %v2248
    %v2421 = vpack.c.b16 %v2257, %v2253
    %v2422 = vpack.c.b16 %v2258, %v2254
    %v2423 = vpack.c.b16 %v2259, %v2255
    %v2424 = vpack.c.b16 %v2260, %v2256
    %v2425 = vpack.c.b16 %v2265, %v2261
    %v2426 = vpack.c.b16 %v2266, %v2262
    %v2427 = vpack.c.b16 %v2267, %v2263
    %v2428 = vpack.c.b16 %v2268, %v2264
    %v2429 = vpack.c.b16 %v2273, %v2269
    %v2430 = vpack.c.b16 %v2274, %v2270
    %v2431 = vpack.c.b16 %v2275, %v2271
    %v2432 = vpack.c.b16 %v2276, %v2272
    %v2433 = vpack.c.b16 %v2281, %v2277
    %v2434 = vpack.c.b16 %v2282, %v2278
    %v2435 = vpack.c.b16 %v2283, %v2279
    %v2436 = vpack.c.b16 %v2284, %v2280
    %v2437 = vpack.c.b16 %v2289, %v2285
    %v2438 = vpack.c.b16 %v2290, %v2286
    %v2439 = vpack.c.b16 %v2291, %v2287
    %v2440 = vpack.c.b16 %v2292, %v2288
    %v2441 = vpack.c.b16 %v2297, %v2293
    %v2442 = vpack.c.b16 %v2298, %v2294
    %v2443 = vpack.c.b16 %v2299, %v2295
    %v2444 = vpack.c.b16 %v2300, %v2296
    %v2445 = vpack.c.b16 %v2305, %v2301
    %v2446 = vpack.c.b16 %v2306, %v2302
    %v2447 = vpack.c.b16 %v2307, %v2303
    %v2448 = vpack.c.b16 %v2308, %v2304
    %v2449 = vpack.c.b16 %v2313, %v2309
    %v2450 = vpack.c.b16 %v2314, %v2310
    %v2451 = vpack.c.b16 %v2315, %v2311
    %v2452 = vpack.c.b16 %v2316, %v2312
    %v2453 = vpack.c.b16 %v2321, %v2317
    %v2454 = vpack.c.b16 %v2322, %v2318
    %v2455 = vpack.c.b16 %v2323, %v2319
    %v2456 = vpack.c.b16 %v2324, %v2320
    %v2457 = vpack.c.b16 %v2329, %v2325
    %v2458 = vpack.c.b16 %v2330, %v2326
    %v2459 = vpack.c.b16 %v2331, %v2327
    %v2460 = vpack.c.b16 %v2332, %v2328
    %2589 = vmatprep.subr.bf16.mxu0 %v2334
    %2590 = vmatpush1.bf16.msra.mxu0 %v2333
    %2591 = vmatprep.subr.bf16.mxu0 %v2338
    %2592 = vmatpush1.bf16.msra.mxu0 %v2337
    %2593 = vmatprep.subr.bf16.mxu0 %v2342
    %2594 = vmatpush1.bf16.msra.mxu0 %v2341
    %2595 = vmatprep.subr.bf16.mxu0 %v2346
    %2596 = vmatpush1.bf16.msra.mxu0 %v2345
    %2597 = vmatprep.subr.bf16.mxu0 %v2350
    %2598 = vmatpush1.bf16.msra.mxu0 %v2349
    %2599 = vmatprep.subr.bf16.mxu0 %v2354
    %2600 = vmatpush1.bf16.msra.mxu0 %v2353
    %2601 = vmatprep.subr.bf16.mxu0 %v2358
    %2602 = vmatpush1.bf16.msra.mxu0 %v2357
    %2603 = vmatprep.subr.bf16.mxu0 %v2362
    %2604 = vmatpush1.bf16.msra.mxu0 %v2361
    %2605 = vmatprep.subr.bf16.mxu0 %v2366
    %2606 = vmatpush1.bf16.msra.mxu0 %v2365
    %2607 = vmatprep.subr.bf16.mxu0 %v2370
    %2608 = vmatpush1.bf16.msra.mxu0 %v2369
    %2609 = vmatprep.subr.bf16.mxu0 %v2374
    %2610 = vmatpush1.bf16.msra.mxu0 %v2373
    %2611 = vmatprep.subr.bf16.mxu0 %v2378
    %2612 = vmatpush1.bf16.msra.mxu0 %v2377
    %2613 = vmatprep.subr.bf16.mxu0 %v2382
    %2614 = vmatpush1.bf16.msra.mxu0 %v2381
    %2615 = vmatprep.subr.bf16.mxu0 %v2386
    %2616 = vmatpush1.bf16.msra.mxu0 %v2385
    %2617 = vmatprep.subr.bf16.mxu0 %v2390
    %2618 = vmatpush1.bf16.msra.mxu0 %v2389
    %2619 = vmatprep.subr.bf16.mxu0 %v2394
    %2620 = vmatpush1.bf16.msra.mxu0 %v2393
    %2621 = vmatprep.mubr.bf16.mxu0 %v1796
    %2622 = vmatmul.mubr.bf16.gmra.mrb[0].mxu0 %v1795
    %v2623 = vpop.f32.mrb[0].mxu0
    %v2624 = vadd.f32 %v1932, %v2623
    %v2625 = vpop.f32.mrb[0].mxu0
    %v2626 = vadd.f32 %v1936, %v2625
    %v2627 = vpop.f32.mrb[0].mxu0
    %v2628 = vpop.f32.mrb[0].mxu0
    %2629 = vdwg.mxu0
    %2630 = vmatprep.subr.bf16.mxu0 %v2398
    %2631 = vmatpush1.bf16.msra.mxu0 %v2397
    %2632 = vmatprep.subr.bf16.mxu0 %v2402
    %2633 = vmatpush1.bf16.msra.mxu0 %v2401
    %2634 = vmatprep.subr.bf16.mxu0 %v2406
    %2635 = vmatpush1.bf16.msra.mxu0 %v2405
    %2636 = vmatprep.subr.bf16.mxu0 %v2410
    %2637 = vmatpush1.bf16.msra.mxu0 %v2409
    %2638 = vmatprep.subr.bf16.mxu0 %v2414
    %2639 = vmatpush1.bf16.msra.mxu0 %v2413
    %2640 = vmatprep.subr.bf16.mxu0 %v2418
    %2641 = vmatpush1.bf16.msra.mxu0 %v2417
    %2642 = vmatprep.subr.bf16.mxu0 %v2422
    %2643 = vmatpush1.bf16.msra.mxu0 %v2421
    %2644 = vmatprep.subr.bf16.mxu0 %v2426
    %2645 = vmatpush1.bf16.msra.mxu0 %v2425
    %2646 = vmatprep.subr.bf16.mxu0 %v2430
    %2647 = vmatpush1.bf16.msra.mxu0 %v2429
    %2648 = vmatprep.subr.bf16.mxu0 %v2434
    %2649 = vmatpush1.bf16.msra.mxu0 %v2433
    %2650 = vmatprep.subr.bf16.mxu0 %v2438
    %2651 = vmatpush1.bf16.msra.mxu0 %v2437
    %2652 = vmatprep.subr.bf16.mxu0 %v2442
    %2653 = vmatpush1.bf16.msra.mxu0 %v2441
    %2654 = vmatprep.subr.bf16.mxu0 %v2446
    %2655 = vmatpush1.bf16.msra.mxu0 %v2445
    %2656 = vmatprep.subr.bf16.mxu0 %v2450
    %2657 = vmatpush1.bf16.msra.mxu0 %v2449
    %2658 = vmatprep.subr.bf16.mxu0 %v2454
    %2659 = vmatpush1.bf16.msra.mxu0 %v2453
    %2660 = vmatprep.subr.bf16.mxu0 %v2458
    %2661 = vmatpush1.bf16.msra.mxu0 %v2457
    %2662 = vmatprep.mubr.bf16.mxu0 %v1798
    %2663 = vmatmul.mubr.bf16.gmra.mrb[0].mxu0 %v1797
    %v2664 = vpop.f32.mrb[0].mxu0
    %v2665 = vadd.f32 %v2624, %v2664
    %v2666 = vpop.f32.mrb[0].mxu0
    %v2667 = vadd.f32 %v2626, %v2666
    %v2668 = vpop.f32.mrb[0].mxu0
    %v2669 = vpop.f32.mrb[0].mxu0
    %2670 = vdwg.mxu0
    %2671 = vmatprep.subr.bf16.mxu0 %v2336
    %2672 = vmatpush1.bf16.msra.mxu0 %v2335
    %2673 = vmatprep.subr.bf16.mxu0 %v2340
    %2674 = vmatpush1.bf16.msra.mxu0 %v2339
    %2675 = vmatprep.subr.bf16.mxu0 %v2344
    %2676 = vmatpush1.bf16.msra.mxu0 %v2343
    %2677 = vmatprep.subr.bf16.mxu0 %v2348
    %2678 = vmatpush1.bf16.msra.mxu0 %v2347
    %2679 = vmatprep.subr.bf16.mxu0 %v2352
    %2680 = vmatpush1.bf16.msra.mxu0 %v2351
    %2681 = vmatprep.subr.bf16.mxu0 %v2356
    %2682 = vmatpush1.bf16.msra.mxu0 %v2355
    %2683 = vmatprep.subr.bf16.mxu0 %v2360
    %2684 = vmatpush1.bf16.msra.mxu0 %v2359
    %2685 = vmatprep.subr.bf16.mxu0 %v2364
    %2686 = vmatpush1.bf16.msra.mxu0 %v2363
    %2687 = vmatprep.subr.bf16.mxu0 %v2368
    %2688 = vmatpush1.bf16.msra.mxu0 %v2367
    %2689 = vmatprep.subr.bf16.mxu0 %v2372
    %2690 = vmatpush1.bf16.msra.mxu0 %v2371
    %2691 = vmatprep.subr.bf16.mxu0 %v2376
    %2692 = vmatpush1.bf16.msra.mxu0 %v2375
    %2693 = vmatprep.subr.bf16.mxu0 %v2380
    %2694 = vmatpush1.bf16.msra.mxu0 %v2379
    %2695 = vmatprep.subr.bf16.mxu0 %v2384
    %2696 = vmatpush1.bf16.msra.mxu0 %v2383
    %2697 = vmatprep.subr.bf16.mxu0 %v2388
    %2698 = vmatpush1.bf16.msra.mxu0 %v2387
    %2699 = vmatprep.subr.bf16.mxu0 %v2392
    %2700 = vmatpush1.bf16.msra.mxu0 %v2391
    %2701 = vmatprep.subr.bf16.mxu0 %v2396
    %2702 = vmatpush1.bf16.msra.mxu0 %v2395
    %2703 = vmatprep.mubr.bf16.mxu0 %v1796
    %2704 = vmatmul.mubr.bf16.gmra.mrb[0].mxu0 %v1795
    %v2705 = vpop.f32.mrb[0].mxu0
    %v2706 = vadd.f32 %v1940, %v2705
    %v2707 = vpop.f32.mrb[0].mxu0
    %v2708 = vadd.f32 %v1944, %v2707
    %v2709 = vpop.f32.mrb[0].mxu0
    %v2710 = vpop.f32.mrb[0].mxu0
    %2711 = vdwg.mxu0
    %2712 = vmatprep.subr.bf16.mxu0 %v2400
    %2713 = vmatpush1.bf16.msra.mxu0 %v2399
    %2714 = vmatprep.subr.bf16.mxu0 %v2404
    %2715 = vmatpush1.bf16.msra.mxu0 %v2403
    %2716 = vmatprep.subr.bf16.mxu0 %v2408
    %2717 = vmatpush1.bf16.msra.mxu0 %v2407
    %2718 = vmatprep.subr.bf16.mxu0 %v2412
    %2719 = vmatpush1.bf16.msra.mxu0 %v2411
    %2720 = vmatprep.subr.bf16.mxu0 %v2416
    %2721 = vmatpush1.bf16.msra.mxu0 %v2415
    %2722 = vmatprep.subr.bf16.mxu0 %v2420
    %2723 = vmatpush1.bf16.msra.mxu0 %v2419
    %2724 = vmatprep.subr.bf16.mxu0 %v2424
    %2725 = vmatpush1.bf16.msra.mxu0 %v2423
    %2726 = vmatprep.subr.bf16.mxu0 %v2428
    %2727 = vmatpush1.bf16.msra.mxu0 %v2427
    %2728 = vmatprep.subr.bf16.mxu0 %v2432
    %2729 = vmatpush1.bf16.msra.mxu0 %v2431
    %2730 = vmatprep.subr.bf16.mxu0 %v2436
    %2731 = vmatpush1.bf16.msra.mxu0 %v2435
    %2732 = vmatprep.subr.bf16.mxu0 %v2440
    %2733 = vmatpush1.bf16.msra.mxu0 %v2439
    %2734 = vmatprep.subr.bf16.mxu0 %v2444
    %2735 = vmatpush1.bf16.msra.mxu0 %v2443
    %2736 = vmatprep.subr.bf16.mxu0 %v2448
    %2737 = vmatpush1.bf16.msra.mxu0 %v2447
    %2738 = vmatprep.subr.bf16.mxu0 %v2452
    %2739 = vmatpush1.bf16.msra.mxu0 %v2451
    %2740 = vmatprep.subr.bf16.mxu0 %v2456
    %2741 = vmatpush1.bf16.msra.mxu0 %v2455
    %2742 = vmatprep.subr.bf16.mxu0 %v2460
    %2743 = vmatpush1.bf16.msra.mxu0 %v2459
    %2744 = vmatprep.mubr.bf16.mxu0 %v1798
    %2745 = vmatmul.mubr.bf16.gmra.mrb[0].mxu0 %v1797
    %v2746 = vpop.f32.mrb[0].mxu0
    %v2747 = vadd.f32 %v2706, %v2746
    %v2748 = vpop.f32.mrb[0].mxu0
    %v2749 = vadd.f32 %v2708, %v2748
    %v2750 = vpop.f32.mrb[0].mxu0
    %v2751 = vpop.f32.mrb[0].mxu0
    %2752 = vdwg.mxu0
    %v2753 = vmax.f32 %v2665, 0.0
    %v2754 = vmax.f32 %v2667, 0.0
    %v2755 = vmax.f32 %v2747, 0.0
    %v2756 = vmax.f32 %v2749, 0.0
    %v2757 = vpack.c.bf16 %v2753, %v2753
    %v2758 = vpack.c.bf16 %v2754, %v2754
    %v2759 = vpack.c.bf16 %v2755, %v2755
    %v2760 = vpack.c.bf16 %v2756, %v2756
    %v2761 = vld [vmem:[#allocation6] sm:$0xf]
    %v2762 = vld [vmem:[#allocation6 + $0x4] sm:$0xf]
    %v2763 = vld [vmem:[#allocation6 + $0x8] sm:$0xf]
    %v2764 = vld [vmem:[#allocation6 + $0xc] sm:$0xf]
    %v2765 = vld [vmem:[#allocation6 + $0x10] sm:$0xf]
    %v2766 = vld [vmem:[#allocation6 + $0x14] sm:$0xf]
    %v2767 = vld [vmem:[#allocation6 + $0x18] sm:$0xf]
    %v2768 = vld [vmem:[#allocation6 + $0x1c] sm:$0xf]
    %v2769 = vld [vmem:[#allocation6 + $0x20] sm:$0xf]
    %v2770 = vld [vmem:[#allocation6 + $0x24] sm:$0xf]
    %v2771 = vld [vmem:[#allocation6 + $0x28] sm:$0xf]
    %v2772 = vld [vmem:[#allocation6 + $0x2c] sm:$0xf]
    %v2773 = vld [vmem:[#allocation6 + $0x30] sm:$0xf]
    %v2774 = vld [vmem:[#allocation6 + $0x34] sm:$0xf]
    %v2775 = vld [vmem:[#allocation6 + $0x38] sm:$0xf]
    %v2776 = vld [vmem:[#allocation6 + $0x3c] sm:$0xf]
    %v2777 = vld [vmem:[#allocation6 + $0x40] sm:$0xf]
    %v2778 = vld [vmem:[#allocation6 + $0x44] sm:$0xf]
    %v2779 = vld [vmem:[#allocation6 + $0x48] sm:$0xf]
    %v2780 = vld [vmem:[#allocation6 + $0x4c] sm:$0xf]
    %v2781 = vld [vmem:[#allocation6 + $0x50] sm:$0xf]
    %v2782 = vld [vmem:[#allocation6 + $0x54] sm:$0xf]
    %v2783 = vld [vmem:[#allocation6 + $0x58] sm:$0xf]
    %v2784 = vld [vmem:[#allocation6 + $0x5c] sm:$0xf]
    %v2785 = vld [vmem:[#allocation6 + $0x60] sm:$0xf]
    %v2786 = vld [vmem:[#allocation6 + $0x64] sm:$0xf]
    %v2787 = vld [vmem:[#allocation6 + $0x68] sm:$0xf]
    %v2788 = vld [vmem:[#allocation6 + $0x6c] sm:$0xf]
    %v2789 = vld [vmem:[#allocation6 + $0x70] sm:$0xf]
    %v2790 = vld [vmem:[#allocation6 + $0x74] sm:$0xf]
    %v2791 = vld [vmem:[#allocation6 + $0x78] sm:$0xf]
    %v2792 = vld [vmem:[#allocation6 + $0x7c] sm:$0xf]
    %v2793 = vld [vmem:[#allocation6 + $0x80] sm:$0xf]
    %v2794 = vld [vmem:[#allocation6 + $0x84] sm:$0xf]
    %v2795 = vld [vmem:[#allocation6 + $0x88] sm:$0xf]
    %v2796 = vld [vmem:[#allocation6 + $0x8c] sm:$0xf]
    %v2797 = vld [vmem:[#allocation6 + $0x90] sm:$0xf]
    %v2798 = vld [vmem:[#allocation6 + $0x94] sm:$0xf]
    %v2799 = vld [vmem:[#allocation6 + $0x98] sm:$0xf]
    %v2800 = vld [vmem:[#allocation6 + $0x9c] sm:$0xf]
    %v2801 = vld [vmem:[#allocation6 + $0xa0] sm:$0xf]
    %v2802 = vld [vmem:[#allocation6 + $0xa4] sm:$0xf]
    %v2803 = vld [vmem:[#allocation6 + $0xa8] sm:$0xf]
    %v2804 = vld [vmem:[#allocation6 + $0xac] sm:$0xf]
    %v2805 = vld [vmem:[#allocation6 + $0xb0] sm:$0xf]
    %v2806 = vld [vmem:[#allocation6 + $0xb4] sm:$0xf]
    %v2807 = vld [vmem:[#allocation6 + $0xb8] sm:$0xf]
    %v2808 = vld [vmem:[#allocation6 + $0xbc] sm:$0xf]
    %v2809 = vld [vmem:[#allocation6 + $0xc0] sm:$0xf]
    %v2810 = vld [vmem:[#allocation6 + $0xc4] sm:$0xf]
    %v2811 = vld [vmem:[#allocation6 + $0xc8] sm:$0xf]
    %v2812 = vld [vmem:[#allocation6 + $0xcc] sm:$0xf]
    %v2813 = vld [vmem:[#allocation6 + $0xd0] sm:$0xf]
    %v2814 = vld [vmem:[#allocation6 + $0xd4] sm:$0xf]
    %v2815 = vld [vmem:[#allocation6 + $0xd8] sm:$0xf]
    %v2816 = vld [vmem:[#allocation6 + $0xdc] sm:$0xf]
    %v2817 = vld [vmem:[#allocation6 + $0xe0] sm:$0xf]
    %v2818 = vld [vmem:[#allocation6 + $0xe4] sm:$0xf]
    %v2819 = vld [vmem:[#allocation6 + $0xe8] sm:$0xf]
    %v2820 = vld [vmem:[#allocation6 + $0xec] sm:$0xf]
    %v2821 = vld [vmem:[#allocation6 + $0xf0] sm:$0xf]
    %v2822 = vld [vmem:[#allocation6 + $0xf4] sm:$0xf]
    %v2823 = vld [vmem:[#allocation6 + $0xf8] sm:$0xf]
    %v2824 = vld [vmem:[#allocation6 + $0xfc] sm:$0xf]
    %v2825 = vld [vmem:[%s6] sm:$0x1]
    %v2827 = vlaneseq
    %v2828 = vshrl.u32 %v2827, 7
    %v2829 = vsub.s32 0, %v2828
    %v2830 = vrot.slane %v2825, %v2829
    %v2896 = vunpack.c.l.b16 %v2761
    %v2897 = vunpack.c.l.b16 %v2762
    %v2898 = vunpack.c.l.b16 %v2763
    %v2899 = vunpack.c.l.b16 %v2764
    %v2900 = vunpack.c.l.b16 %v2765
    %v2901 = vunpack.c.l.b16 %v2766
    %v2902 = vunpack.c.l.b16 %v2767
    %v2903 = vunpack.c.l.b16 %v2768
    %v2904 = vunpack.c.l.b16 %v2769
    %v2905 = vunpack.c.l.b16 %v2770
    %v2906 = vunpack.c.l.b16 %v2771
    %v2907 = vunpack.c.l.b16 %v2772
    %v2908 = vunpack.c.l.b16 %v2773
    %v2909 = vunpack.c.l.b16 %v2774
    %v2910 = vunpack.c.l.b16 %v2775
    %v2911 = vunpack.c.l.b16 %v2776
    %v2912 = vunpack.c.l.b16 %v2777
    %v2913 = vunpack.c.l.b16 %v2778
    %v2914 = vunpack.c.l.b16 %v2779
    %v2915 = vunpack.c.l.b16 %v2780
    %v2916 = vunpack.c.l.b16 %v2781
    %v2917 = vunpack.c.l.b16 %v2782
    %v2918 = vunpack.c.l.b16 %v2783
    %v2919 = vunpack.c.l.b16 %v2784
    %v2920 = vunpack.c.l.b16 %v2785
    %v2921 = vunpack.c.l.b16 %v2786
    %v2922 = vunpack.c.l.b16 %v2787
    %v2923 = vunpack.c.l.b16 %v2788
    %v2924 = vunpack.c.l.b16 %v2789
    %v2925 = vunpack.c.l.b16 %v2790
    %v2926 = vunpack.c.l.b16 %v2791
    %v2927 = vunpack.c.l.b16 %v2792
    %v2928 = vunpack.c.l.b16 %v2793
    %v2929 = vunpack.c.l.b16 %v2794
    %v2930 = vunpack.c.l.b16 %v2795
    %v2931 = vunpack.c.l.b16 %v2796
    %v2932 = vunpack.c.l.b16 %v2797
    %v2933 = vunpack.c.l.b16 %v2798
    %v2934 = vunpack.c.l.b16 %v2799
    %v2935 = vunpack.c.l.b16 %v2800
    %v2936 = vunpack.c.l.b16 %v2801
    %v2937 = vunpack.c.l.b16 %v2802
    %v2938 = vunpack.c.l.b16 %v2803
    %v2939 = vunpack.c.l.b16 %v2804
    %v2940 = vunpack.c.l.b16 %v2805
    %v2941 = vunpack.c.l.b16 %v2806
    %v2942 = vunpack.c.l.b16 %v2807
    %v2943 = vunpack.c.l.b16 %v2808
    %v2944 = vunpack.c.l.b16 %v2809
    %v2945 = vunpack.c.l.b16 %v2810
    %v2946 = vunpack.c.l.b16 %v2811
    %v2947 = vunpack.c.l.b16 %v2812
    %v2948 = vunpack.c.l.b16 %v2813
    %v2949 = vunpack.c.l.b16 %v2814
    %v2950 = vunpack.c.l.b16 %v2815
    %v2951 = vunpack.c.l.b16 %v2816
    %v2952 = vunpack.c.l.b16 %v2817
    %v2953 = vunpack.c.l.b16 %v2818
    %v2954 = vunpack.c.l.b16 %v2819
    %v2955 = vunpack.c.l.b16 %v2820
    %v2956 = vunpack.c.l.b16 %v2821
    %v2957 = vunpack.c.l.b16 %v2822
    %v2958 = vunpack.c.l.b16 %v2823
    %v2959 = vunpack.c.l.b16 %v2824
    %v2960 = vpack.c.b16 %v2897, %v2896
    %v2961 = vpack.c.b16 %v2899, %v2898
    %v2962 = vpack.c.b16 %v2901, %v2900
    %v2963 = vpack.c.b16 %v2903, %v2902
    %v2964 = vpack.c.b16 %v2905, %v2904
    %v2965 = vpack.c.b16 %v2907, %v2906
    %v2966 = vpack.c.b16 %v2909, %v2908
    %v2967 = vpack.c.b16 %v2911, %v2910
    %v2968 = vpack.c.b16 %v2913, %v2912
    %v2969 = vpack.c.b16 %v2915, %v2914
    %v2970 = vpack.c.b16 %v2917, %v2916
    %v2971 = vpack.c.b16 %v2919, %v2918
    %v2972 = vpack.c.b16 %v2921, %v2920
    %v2973 = vpack.c.b16 %v2923, %v2922
    %v2974 = vpack.c.b16 %v2925, %v2924
    %v2975 = vpack.c.b16 %v2927, %v2926
    %v2976 = vpack.c.b16 %v2929, %v2928
    %v2977 = vpack.c.b16 %v2931, %v2930
    %v2978 = vpack.c.b16 %v2933, %v2932
    %v2979 = vpack.c.b16 %v2935, %v2934
    %v2980 = vpack.c.b16 %v2937, %v2936
    %v2981 = vpack.c.b16 %v2939, %v2938
    %v2982 = vpack.c.b16 %v2941, %v2940
    %v2983 = vpack.c.b16 %v2943, %v2942
    %v2984 = vpack.c.b16 %v2945, %v2944
    %v2985 = vpack.c.b16 %v2947, %v2946
    %v2986 = vpack.c.b16 %v2949, %v2948
    %v2987 = vpack.c.b16 %v2951, %v2950
    %v2988 = vpack.c.b16 %v2953, %v2952
    %v2989 = vpack.c.b16 %v2955, %v2954
    %v2990 = vpack.c.b16 %v2957, %v2956
    %v2991 = vpack.c.b16 %v2959, %v2958
    %3024 = vmatprep.subr.bf16.mxu0 0
    %3025 = vmatpush1.bf16.msra.mxu0 %v2960
    %3026 = vmatprep.subr.bf16.mxu0 0
    %3027 = vmatpush1.bf16.msra.mxu0 %v2961
    %3028 = vmatprep.subr.bf16.mxu0 0
    %3029 = vmatpush1.bf16.msra.mxu0 %v2962
    %3030 = vmatprep.subr.bf16.mxu0 0
    %3031 = vmatpush1.bf16.msra.mxu0 %v2963
    %3032 = vmatprep.subr.bf16.mxu0 0
    %3033 = vmatpush1.bf16.msra.mxu0 %v2964
    %3034 = vmatprep.subr.bf16.mxu0 0
    %3035 = vmatpush1.bf16.msra.mxu0 %v2965
    %3036 = vmatprep.subr.bf16.mxu0 0
    %3037 = vmatpush1.bf16.msra.mxu0 %v2966
    %3038 = vmatprep.subr.bf16.mxu0 0
    %3039 = vmatpush1.bf16.msra.mxu0 %v2967
    %3040 = vmatprep.subr.bf16.mxu0 0
    %3041 = vmatpush1.bf16.msra.mxu0 %v2968
    %3042 = vmatprep.subr.bf16.mxu0 0
    %3043 = vmatpush1.bf16.msra.mxu0 %v2969
    %3044 = vmatprep.subr.bf16.mxu0 0
    %3045 = vmatpush1.bf16.msra.mxu0 %v2970
    %3046 = vmatprep.subr.bf16.mxu0 0
    %3047 = vmatpush1.bf16.msra.mxu0 %v2971
    %3048 = vmatprep.subr.bf16.mxu0 0
    %3049 = vmatpush1.bf16.msra.mxu0 %v2972
    %3050 = vmatprep.subr.bf16.mxu0 0
    %3051 = vmatpush1.bf16.msra.mxu0 %v2973
    %3052 = vmatprep.subr.bf16.mxu0 0
    %3053 = vmatpush1.bf16.msra.mxu0 %v2974
    %3054 = vmatprep.subr.bf16.mxu0 0
    %3055 = vmatpush1.bf16.msra.mxu0 %v2975
    %3056 = vmatprep.mubr.bf16.mxu0 %v2758
    %3057 = vmatmul.mubr.bf16.gmra.mrb[0].mxu0 %v2757
    %v3058 = vpop.f32.mrb[0].mxu0
    %v3059 = vadd.f32 %v2830, %v3058
    %v3060 = vpop.f32.mrb[0].mxu0
    %v3061 = vpop.f32.mrb[0].mxu0
    %v3062 = vpop.f32.mrb[0].mxu0
    %3063 = vdwg.mxu0
    %3064 = vmatprep.subr.bf16.mxu0 0
    %3065 = vmatpush1.bf16.msra.mxu0 %v2976
    %3066 = vmatprep.subr.bf16.mxu0 0
    %3067 = vmatpush1.bf16.msra.mxu0 %v2977
    %3068 = vmatprep.subr.bf16.mxu0 0
    %3069 = vmatpush1.bf16.msra.mxu0 %v2978
    %3070 = vmatprep.subr.bf16.mxu0 0
    %3071 = vmatpush1.bf16.msra.mxu0 %v2979
    %3072 = vmatprep.subr.bf16.mxu0 0
    %3073 = vmatpush1.bf16.msra.mxu0 %v2980
    %3074 = vmatprep.subr.bf16.mxu0 0
    %3075 = vmatpush1.bf16.msra.mxu0 %v2981
    %3076 = vmatprep.subr.bf16.mxu0 0
    %3077 = vmatpush1.bf16.msra.mxu0 %v2982
    %3078 = vmatprep.subr.bf16.mxu0 0
    %3079 = vmatpush1.bf16.msra.mxu0 %v2983
    %3080 = vmatprep.subr.bf16.mxu0 0
    %3081 = vmatpush1.bf16.msra.mxu0 %v2984
    %3082 = vmatprep.subr.bf16.mxu0 0
    %3083 = vmatpush1.bf16.msra.mxu0 %v2985
    %3084 = vmatprep.subr.bf16.mxu0 0
    %3085 = vmatpush1.bf16.msra.mxu0 %v2986
    %3086 = vmatprep.subr.bf16.mxu0 0
    %3087 = vmatpush1.bf16.msra.mxu0 %v2987
    %3088 = vmatprep.subr.bf16.mxu0 0
    %3089 = vmatpush1.bf16.msra.mxu0 %v2988
    %3090 = vmatprep.subr.bf16.mxu0 0
    %3091 = vmatpush1.bf16.msra.mxu0 %v2989
    %3092 = vmatprep.subr.bf16.mxu0 0
    %3093 = vmatpush1.bf16.msra.mxu0 %v2990
    %3094 = vmatprep.subr.bf16.mxu0 0
    %3095 = vmatpush1.bf16.msra.mxu0 %v2991
    %3096 = vmatprep.mubr.bf16.mxu0 %v2760
    %3097 = vmatmul.mubr.bf16.gmra.mrb[0].mxu0 %v2759
    %v3098 = vpop.f32.mrb[0].mxu0
    %v3099 = vadd.f32 %v3059, %v3098
    %v3100 = vpop.f32.mrb[0].mxu0
    %v3101 = vpop.f32.mrb[0].mxu0
    %v3102 = vpop.f32.mrb[0].mxu0
    %3103 = vdwg.mxu0
    %3104 = vst [vmem:[%s7] sm:$0xff] %v3099
    // Predicated region
    $region42: #{neural_network_forward.1} parent=1 // pred_check
      _
    $region43: #{neural_network_forward.1} parent=1 // pred_check_branch
      %3106 = sbr.rel (0) target = $region45
    $region44: #{neural_network_forward.1} parent=1 // pred_region
      _
    $region45: #{neural_network_forward.1} parent=1 // pred_fallthru
      _
    // Predicated region
    $region46: #{neural_network_forward.1} parent=1 // pred_check
      _
    $region47: #{neural_network_forward.1} parent=1 // pred_check_branch
      %3108 = sbr.rel (0) target = $region49
    $region48: #{neural_network_forward.1} parent=1 // pred_region
      _
    $region49: #{neural_network_forward.1} parent=1 // pred_fallthru
      _
    %3109 = vsyncpa [#allocation3], 1
    %3110 = vsyncpa [#allocation5], 1

</llo_original>
